<compile_context>
chip_gen: v5e
topology: v5e:2x2
jax: 0.10.0
libtpu: 0.0.40
codegen_flags: <defaults>
</compile_context>

<pallas_src>
import jax
import jax.numpy as jnp
from jax import lax
from jax.experimental import pallas as pl
from jax.experimental.pallas import tpu as pltpu

# ------------------------------ configuration -------------------------------
C     = 4      # channels
L     = 16     # sequence length (conv "height")
DIM   = 32     # embedding width == TextCNN `dim`
K0    = 5      # kernel_size[0] -> (5, 1)
K1    = 3      # kernel_size[1] -> (3, 1)
POOL  = 2      # pool_size      -> (2, 1)
EPS   = 1e-5   # BatchNorm eps
LANES = 128    # TPU lane width; LP batch samples are packed along lanes
LP    = LANES // DIM          # samples per lane-group (4)
CHUNK = 2      # lane-groups processed per inner-loop iteration (vreg-pressure bound)

LH  = L // 2                  # rows per parity after even/odd split     (8)
L1  = L - K0 + 1              # height after conv1                       (12)
L1P = L1 // POOL              # height after MaxPool2d((2,1))            (6)
L2  = L1P - K1 + 1            # height after conv2                       (4)
NSH = K0 // 2 + 1             # shifted slabs needed per parity          (3)


# --------------------------------- kernel -----------------------------------
def textcnn_kernel(w1_ref, t1_ref, w2_ref, t2_ref, x_ref, o_ref):
    """One grid step == nchunks * CHUNK lane-groups == that * LP batch samples.

    w1_ref : SMEM (C, K0)                  conv1 weight (width-1), BN scale folded
    t1_ref : SMEM (C,)                     folded BN shift (+ conv1 bias)
    w2_ref : SMEM (C, C*K1)                conv2 weight flattened (C_in, K1), BN folded
    t2_ref : SMEM (C,)                     folded BN shift (+ conv2 bias)
    x_ref  : VMEM (nchunks, CHUNK, L, 128) lane-packed input; rows = evens then odds
    o_ref  : VMEM (nchunks, CHUNK, 128)    lane-dense output
    """
    nchunks = x_ref.shape[0]

    # Hoist all scalar (SMEM) reads out of the chunk loop.
    w1 = [[w1_ref[c, i] for i in range(K0)] for c in range(C)]
    b1 = [t1_ref[c] for c in range(C)]
    w2 = [[w2_ref[co, j] for j in range(C * K1)] for co in range(C)]
    b2 = [t2_ref[c] for c in range(C)]

    @pl.loop(0, nchunks)
    def _(chunk):
        x = x_ref[chunk]                       # (CHUNK, L, 128), evens then odds
        xe = x[:, 0:LH, :]                     # even seq rows 0,2,...,14
        xo = x[:, LH:L, :]                     # odd  seq rows 1,3,...,15

        # Shifted slabs, sliced ONCE and shared by every conv1 channel.
        se = [xe[:, a:a + L1P, :] for a in range(NSH)]   # (CHUNK, 6, 128) each
        so = [xo[:, a:a + L1P, :] for a in range(NSH)]

        # net1 (Conv2d(1,C,(5,1)) + BN + ReLU + MaxPool2d((2,1))) interleaved with
        # the net2 conv accumulation so `pooled` never has to be held for long.
        acc2 = [None] * C
        for ci in range(C):
            wc = w1[ci]
            # conv1 even / odd output rows (width-1 kernel -> pure sublane shifts)
            ye = (wc[0] * se[0] + wc[1] * so[0] + wc[2] * se[1]
                  + wc[3] * so[1] + wc[4] * se[2])
            yo = (wc[0] * so[0] + wc[1] * se[1] + wc[2] * so[1]
                  + wc[3] * se[2] + wc[4] * so[2])
            # bias/BN-shift + ReLU + MaxPool2d((2,1)), fused into one max
            pooled = jnp.maximum(jnp.maximum(ye, yo) + b1[ci], 0.0)  # (CHUNK, 6, 128)
            # net2 conv taps for this input channel, accumulated immediately
            for i in range(K1):
                sh = pooled[:, i:i + L2, :]                          # (CHUNK, 4, 128)
                for co in range(C):
                    t = w2[co][ci * K1 + i] * sh
                    acc2[co] = t if acc2[co] is None else acc2[co] + t

        # net2 BN+bias (folded) + ReLU, then AdaptiveMaxPool over height and the
        # outer AdaptiveMaxPool over channels (== one max over channels & height).
        # TODO(synk): general adaptive-pool rebinning (input width != dim) and
        # method='mean' are not implemented; PJFNN keeps width == dim throughout.
        zmax = None
        for co in range(C):
            z = jnp.maximum(acc2[co] + b2[co], 0.0)                  # (CHUNK, 4, 128)
            zmax = z if zmax is None else jnp.maximum(zmax, z)
        o_ref[chunk] = zmax.max(axis=1)                              # (CHUNK, 128)


# -------------------------------- wrapper ------------------------------------
def textcnn_forward(x, params, block_groups=128):
    """x: (N, 1, L, DIM) float32 (NCHW, in_channels=1). Returns (N, DIM)."""
    n = x.shape[0]
    assert x.shape[1:] == (1, L, DIM), x.shape
    assert LANES % DIM == 0  # TODO(synk): handle DIM that does not divide 128

    # Fold BN (inference, running stats) + conv bias:
    #   BN(conv(x; w) + b) = conv(x; s*w) + (beta - s*mean + s*b), s = g/sqrt(v+eps)
    s1 = params["g1"] / jnp.sqrt(params["v1"] + EPS)
    w1s = s1[:, None] * params["w1"].reshape(C, K0)
    t1 = params["beta1"] - s1 * params["m1"] + s1 * params["b1"]
    s2 = params["g2"] / jnp.sqrt(params["v2"] + EPS)
    w2s = s2[:, None] * params["w2"].reshape(C, C * K1)
    t2 = params["beta2"] - s2 * params["m2"] + s2 * params["b2"]

    # Tiling: LP samples per 128-lane group; bg lane-groups per grid step, processed
    # CHUNK at a time inside the kernel.  Keep >=2 grid steps when there is enough
    # work (v7x dual TensorCore); VMEM use (~bg*8KB double-buffered) is tiny on all
    # of v5e/v6e/v7x at bg<=128.
    ng = pl.cdiv(n, LP)
    bg = min(block_groups, max(1, pl.cdiv(ng, 2)))
    bg = pl.cdiv(bg, CHUNK) * CHUNK
    ng_pad = pl.cdiv(ng, bg) * bg
    n_pad = ng_pad * LP
    num_blocks = ng_pad // bg
    nchunks = bg // CHUNK

    xs = x.reshape(n, L, DIM)
    if n_pad > n:
        xs = jnp.concatenate([xs, jnp.zeros((n_pad - n, L, DIM), xs.dtype)], axis=0)
    # Lane-pack LP samples per lane group (legal: conv kernel width is 1) and reorder
    # seq rows to evens-then-odds so the in-kernel MaxPool2d((2,1)) is stride-free.
    # [g, p, m, parity, d] -> [g, parity, m, p, d]; packed row = parity*LH + m.
    xs = (xs.reshape(ng_pad, LP, LH, POOL, DIM)
            .transpose(0, 3, 2, 1, 4)
            .reshape(ng_pad, L, LANES))
    xs = xs.reshape(num_blocks * nchunks, CHUNK, L, LANES)

    smem = lambda: pl.BlockSpec(memory_space=pltpu.MemorySpace.SMEM)

    out = pl.pallas_call(
        textcnn_kernel,
        out_shape=jax.ShapeDtypeStruct((num_blocks * nchunks, CHUNK, LANES), jnp.float32),
        grid=(num_blocks,),
        in_specs=[smem(), smem(), smem(), smem(),
                  pl.BlockSpec((nchunks, CHUNK, L, LANES), lambda g: (g, 0, 0, 0))],
        out_specs=pl.BlockSpec((nchunks, CHUNK, LANES), lambda g: (g, 0, 0)),
        compiler_params=pltpu.CompilerParams(
            dimension_semantics=("parallel",)),
    )(w1s, t1, w2s, t2, xs)

    # Unpack lanes back to samples and drop padding.
    return out.reshape(ng_pad, LP, DIM).reshape(n_pad, DIM)[:n]


# ----------------------- pure-JAX reference (for check) ----------------------
def textcnn_ref(x, params):
    def bn(y, g, b, m, v):
        s = g / jnp.sqrt(v + EPS)
        return s[None, :, None, None] * (y - m[None, :, None, None]) + b[None, :, None, None]

    y = lax.conv_general_dilated(x, params["w1"], (1, 1), "VALID",
                                 dimension_numbers=("NCHW", "OIHW", "NCHW"))
    y = y + params["b1"][None, :, None, None]
    y = jnp.maximum(bn(y, params["g1"], params["beta1"], params["m1"], params["v1"]), 0.0)
    y = lax.reduce_window(y, -jnp.inf, lax.max,
                          (1, 1, POOL, 1), (1, 1, POOL, 1), "VALID")

    z = lax.conv_general_dilated(y, params["w2"], (1, 1), "VALID",
                                 dimension_numbers=("NCHW", "OIHW", "NCHW"))
    z = z + params["b2"][None, :, None, None]
    z = jnp.maximum(bn(z, params["g2"], params["beta2"], params["m2"], params["v2"]), 0.0)

    z = z.max(axis=2)     # AdaptiveMaxPool2d((1, DIM)) over H, then squeeze(2)
    return z.max(axis=1)  # outer AdaptiveMaxPool2d((1, DIM)) on 3-D input, squeeze(1)


# ------------------------------ param init -----------------------------------
def init_params(key):
    ks = jax.random.split(key, 12)
    p = {}
    p["w1"]    = 0.2 * jax.random.normal(ks[0], (C, 1, K0, 1), jnp.float32)
    p["b1"]    = 0.1 * jax.random.normal(ks[1], (C,), jnp.float32)
    p["g1"]    = 1.0 + 0.1 * jax.random.normal(ks[2], (C,), jnp.float32)
    p["beta1"] = 0.1 * jax.random.normal(ks[3], (C,), jnp.float32)
    p["m1"]    = 0.1 * jax.random.normal(ks[4], (C,), jnp.float32)
    p["v1"]    = jax.random.uniform(ks[5], (C,), jnp.float32, 0.5, 1.5)
    p["w2"]    = 0.2 * jax.random.normal(ks[6], (C, C, K1, 1), jnp.float32)
    p["b2"]    = 0.1 * jax.random.normal(ks[7], (C,), jnp.float32)
    p["g2"]    = 1.0 + 0.1 * jax.random.normal(ks[8], (C,), jnp.float32)
    p["beta2"] = 0.1 * jax.random.normal(ks[9], (C,), jnp.float32)
    p["m2"]    = 0.1 * jax.random.normal(ks[10], (C,), jnp.float32)
    p["v2"]    = jax.random.uniform(ks[11], (C,), jnp.float32, 0.5, 1.5)
    return p


if __name__ == "__main__":
    key = jax.random.PRNGKey(0)
    pkey, xkey = jax.random.split(key)
    params = init_params(pkey)

    # Case 1: N=10 -> 3 lane-groups, zero padding, 2 "parallel" grid steps.
    N = 10
    x = jax.random.normal(xkey, (N, 1, L, DIM), jnp.float32)
    out = jax.block_until_ready(textcnn_forward(x, params))
    ref = jax.block_until_ready(textcnn_ref(x, params))
    assert out.shape == (N, DIM), out.shape
    err = float(jnp.max(jnp.abs(out - ref)))
    assert jnp.allclose(out, ref, rtol=1e-5, atol=1e-5), f"max abs err {err}"

    # Case 2: exercises multi-chunk inner loop (nchunks=2), 3 grid blocks, padding.
    N2 = 37
    x2 = jax.random.normal(jax.random.PRNGKey(1), (N2, 1, L, DIM), jnp.float32)
    out2 = jax.block_until_ready(textcnn_forward(x2, params, block_groups=4))
    ref2 = jax.block_until_ready(textcnn_ref(x2, params))
    err2 = float(jnp.max(jnp.abs(out2 - ref2)))
    assert jnp.allclose(out2, ref2, rtol=1e-5, atol=1e-5), f"max abs err {err2}"

    print("KERNEL_OK")
</pallas_src>

<mosaic_0001>
module attributes {stable_mosaic.version = 11 : i64} {
  func.func @textcnn_kernel(%arg0: i32, %arg1: memref<4x5xf32, #tpu.memory_space<smem>>, %arg2: memref<4xf32, #tpu.memory_space<smem>>, %arg3: memref<4x12xf32, #tpu.memory_space<smem>>, %arg4: memref<4xf32, #tpu.memory_space<smem>>, %arg5: memref<1x2x16x128xf32, #tpu.memory_space<vmem>>, %arg6: memref<1x2x128xf32, #tpu.memory_space<vmem>>) attributes {dimension_semantics = [#tpu.dimension_semantics<parallel>], iteration_bounds = array<i64: 2>, scalar_prefetch = 0 : i64, scratch_operands = 0 : i64, tpu.core_type = #tpu.core_type<tc>, window_params = [{transform_indices = @transform_0, window_bounds = array<i64: 4, 5>}, {transform_indices = @transform_1, window_bounds = array<i64: 4>}, {transform_indices = @transform_2, window_bounds = array<i64: 4, 12>}, {transform_indices = @transform_3, window_bounds = array<i64: 4>}, {transform_indices = @transform_4, window_bounds = array<i64: 1, 2, 16, 128>}, {transform_indices = @transform_5, window_bounds = array<i64: 1, 2, 128>}]} {
    %c0 = arith.constant 0 : index
    %c0_0 = arith.constant 0 : index
    %0 = memref.load %arg1[%c0, %c0_0] : memref<4x5xf32, #tpu.memory_space<smem>>
    %c0_1 = arith.constant 0 : index
    %c1 = arith.constant 1 : index
    %1 = memref.load %arg1[%c0_1, %c1] : memref<4x5xf32, #tpu.memory_space<smem>>
    %c0_2 = arith.constant 0 : index
    %c2 = arith.constant 2 : index
    %2 = memref.load %arg1[%c0_2, %c2] : memref<4x5xf32, #tpu.memory_space<smem>>
    %c0_3 = arith.constant 0 : index
    %c3 = arith.constant 3 : index
    %3 = memref.load %arg1[%c0_3, %c3] : memref<4x5xf32, #tpu.memory_space<smem>>
    %c0_4 = arith.constant 0 : index
    %c4 = arith.constant 4 : index
    %4 = memref.load %arg1[%c0_4, %c4] : memref<4x5xf32, #tpu.memory_space<smem>>
    %c1_5 = arith.constant 1 : index
    %c0_6 = arith.constant 0 : index
    %5 = memref.load %arg1[%c1_5, %c0_6] : memref<4x5xf32, #tpu.memory_space<smem>>
    %c1_7 = arith.constant 1 : index
    %c1_8 = arith.constant 1 : index
    %6 = memref.load %arg1[%c1_7, %c1_8] : memref<4x5xf32, #tpu.memory_space<smem>>
    %c1_9 = arith.constant 1 : index
    %c2_10 = arith.constant 2 : index
    %7 = memref.load %arg1[%c1_9, %c2_10] : memref<4x5xf32, #tpu.memory_space<smem>>
    %c1_11 = arith.constant 1 : index
    %c3_12 = arith.constant 3 : index
    %8 = memref.load %arg1[%c1_11, %c3_12] : memref<4x5xf32, #tpu.memory_space<smem>>
    %c1_13 = arith.constant 1 : index
    %c4_14 = arith.constant 4 : index
    %9 = memref.load %arg1[%c1_13, %c4_14] : memref<4x5xf32, #tpu.memory_space<smem>>
    %c2_15 = arith.constant 2 : index
    %c0_16 = arith.constant 0 : index
    %10 = memref.load %arg1[%c2_15, %c0_16] : memref<4x5xf32, #tpu.memory_space<smem>>
    %c2_17 = arith.constant 2 : index
    %c1_18 = arith.constant 1 : index
    %11 = memref.load %arg1[%c2_17, %c1_18] : memref<4x5xf32, #tpu.memory_space<smem>>
    %c2_19 = arith.constant 2 : index
    %c2_20 = arith.constant 2 : index
    %12 = memref.load %arg1[%c2_19, %c2_20] : memref<4x5xf32, #tpu.memory_space<smem>>
    %c2_21 = arith.constant 2 : index
    %c3_22 = arith.constant 3 : index
    %13 = memref.load %arg1[%c2_21, %c3_22] : memref<4x5xf32, #tpu.memory_space<smem>>
    %c2_23 = arith.constant 2 : index
    %c4_24 = arith.constant 4 : index
    %14 = memref.load %arg1[%c2_23, %c4_24] : memref<4x5xf32, #tpu.memory_space<smem>>
    %c3_25 = arith.constant 3 : index
    %c0_26 = arith.constant 0 : index
    %15 = memref.load %arg1[%c3_25, %c0_26] : memref<4x5xf32, #tpu.memory_space<smem>>
    %c3_27 = arith.constant 3 : index
    %c1_28 = arith.constant 1 : index
    %16 = memref.load %arg1[%c3_27, %c1_28] : memref<4x5xf32, #tpu.memory_space<smem>>
    %c3_29 = arith.constant 3 : index
    %c2_30 = arith.constant 2 : index
    %17 = memref.load %arg1[%c3_29, %c2_30] : memref<4x5xf32, #tpu.memory_space<smem>>
    %c3_31 = arith.constant 3 : index
    %c3_32 = arith.constant 3 : index
    %18 = memref.load %arg1[%c3_31, %c3_32] : memref<4x5xf32, #tpu.memory_space<smem>>
    %c3_33 = arith.constant 3 : index
    %c4_34 = arith.constant 4 : index
    %19 = memref.load %arg1[%c3_33, %c4_34] : memref<4x5xf32, #tpu.memory_space<smem>>
    %c0_35 = arith.constant 0 : index
    %20 = memref.load %arg2[%c0_35] : memref<4xf32, #tpu.memory_space<smem>>
    %c1_36 = arith.constant 1 : index
    %21 = memref.load %arg2[%c1_36] : memref<4xf32, #tpu.memory_space<smem>>
    %c2_37 = arith.constant 2 : index
    %22 = memref.load %arg2[%c2_37] : memref<4xf32, #tpu.memory_space<smem>>
    %c3_38 = arith.constant 3 : index
    %23 = memref.load %arg2[%c3_38] : memref<4xf32, #tpu.memory_space<smem>>
    %c0_39 = arith.constant 0 : index
    %c0_40 = arith.constant 0 : index
    %24 = memref.load %arg3[%c0_39, %c0_40] : memref<4x12xf32, #tpu.memory_space<smem>>
    %c0_41 = arith.constant 0 : index
    %c1_42 = arith.constant 1 : index
    %25 = memref.load %arg3[%c0_41, %c1_42] : memref<4x12xf32, #tpu.memory_space<smem>>
    %c0_43 = arith.constant 0 : index
    %c2_44 = arith.constant 2 : index
    %26 = memref.load %arg3[%c0_43, %c2_44] : memref<4x12xf32, #tpu.memory_space<smem>>
    %c0_45 = arith.constant 0 : index
    %c3_46 = arith.constant 3 : index
    %27 = memref.load %arg3[%c0_45, %c3_46] : memref<4x12xf32, #tpu.memory_space<smem>>
    %c0_47 = arith.constant 0 : index
    %c4_48 = arith.constant 4 : index
    %28 = memref.load %arg3[%c0_47, %c4_48] : memref<4x12xf32, #tpu.memory_space<smem>>
    %c0_49 = arith.constant 0 : index
    %c5 = arith.constant 5 : index
    %29 = memref.load %arg3[%c0_49, %c5] : memref<4x12xf32, #tpu.memory_space<smem>>
    %c0_50 = arith.constant 0 : index
    %c6 = arith.constant 6 : index
    %30 = memref.load %arg3[%c0_50, %c6] : memref<4x12xf32, #tpu.memory_space<smem>>
    %c0_51 = arith.constant 0 : index
    %c7 = arith.constant 7 : index
    %31 = memref.load %arg3[%c0_51, %c7] : memref<4x12xf32, #tpu.memory_space<smem>>
    %c0_52 = arith.constant 0 : index
    %c8 = arith.constant 8 : index
    %32 = memref.load %arg3[%c0_52, %c8] : memref<4x12xf32, #tpu.memory_space<smem>>
    %c0_53 = arith.constant 0 : index
    %c9 = arith.constant 9 : index
    %33 = memref.load %arg3[%c0_53, %c9] : memref<4x12xf32, #tpu.memory_space<smem>>
    %c0_54 = arith.constant 0 : index
    %c10 = arith.constant 10 : index
    %34 = memref.load %arg3[%c0_54, %c10] : memref<4x12xf32, #tpu.memory_space<smem>>
    %c0_55 = arith.constant 0 : index
    %c11 = arith.constant 11 : index
    %35 = memref.load %arg3[%c0_55, %c11] : memref<4x12xf32, #tpu.memory_space<smem>>
    %c1_56 = arith.constant 1 : index
    %c0_57 = arith.constant 0 : index
    %36 = memref.load %arg3[%c1_56, %c0_57] : memref<4x12xf32, #tpu.memory_space<smem>>
    %c1_58 = arith.constant 1 : index
    %c1_59 = arith.constant 1 : index
    %37 = memref.load %arg3[%c1_58, %c1_59] : memref<4x12xf32, #tpu.memory_space<smem>>
    %c1_60 = arith.constant 1 : index
    %c2_61 = arith.constant 2 : index
    %38 = memref.load %arg3[%c1_60, %c2_61] : memref<4x12xf32, #tpu.memory_space<smem>>
    %c1_62 = arith.constant 1 : index
    %c3_63 = arith.constant 3 : index
    %39 = memref.load %arg3[%c1_62, %c3_63] : memref<4x12xf32, #tpu.memory_space<smem>>
    %c1_64 = arith.constant 1 : index
    %c4_65 = arith.constant 4 : index
    %40 = memref.load %arg3[%c1_64, %c4_65] : memref<4x12xf32, #tpu.memory_space<smem>>
    %c1_66 = arith.constant 1 : index
    %c5_67 = arith.constant 5 : index
    %41 = memref.load %arg3[%c1_66, %c5_67] : memref<4x12xf32, #tpu.memory_space<smem>>
    %c1_68 = arith.constant 1 : index
    %c6_69 = arith.constant 6 : index
    %42 = memref.load %arg3[%c1_68, %c6_69] : memref<4x12xf32, #tpu.memory_space<smem>>
    %c1_70 = arith.constant 1 : index
    %c7_71 = arith.constant 7 : index
    %43 = memref.load %arg3[%c1_70, %c7_71] : memref<4x12xf32, #tpu.memory_space<smem>>
    %c1_72 = arith.constant 1 : index
    %c8_73 = arith.constant 8 : index
    %44 = memref.load %arg3[%c1_72, %c8_73] : memref<4x12xf32, #tpu.memory_space<smem>>
    %c1_74 = arith.constant 1 : index
    %c9_75 = arith.constant 9 : index
    %45 = memref.load %arg3[%c1_74, %c9_75] : memref<4x12xf32, #tpu.memory_space<smem>>
    %c1_76 = arith.constant 1 : index
    %c10_77 = arith.constant 10 : index
    %46 = memref.load %arg3[%c1_76, %c10_77] : memref<4x12xf32, #tpu.memory_space<smem>>
    %c1_78 = arith.constant 1 : index
    %c11_79 = arith.constant 11 : index
    %47 = memref.load %arg3[%c1_78, %c11_79] : memref<4x12xf32, #tpu.memory_space<smem>>
    %c2_80 = arith.constant 2 : index
    %c0_81 = arith.constant 0 : index
    %48 = memref.load %arg3[%c2_80, %c0_81] : memref<4x12xf32, #tpu.memory_space<smem>>
    %c2_82 = arith.constant 2 : index
    %c1_83 = arith.constant 1 : index
    %49 = memref.load %arg3[%c2_82, %c1_83] : memref<4x12xf32, #tpu.memory_space<smem>>
    %c2_84 = arith.constant 2 : index
    %c2_85 = arith.constant 2 : index
    %50 = memref.load %arg3[%c2_84, %c2_85] : memref<4x12xf32, #tpu.memory_space<smem>>
    %c2_86 = arith.constant 2 : index
    %c3_87 = arith.constant 3 : index
    %51 = memref.load %arg3[%c2_86, %c3_87] : memref<4x12xf32, #tpu.memory_space<smem>>
    %c2_88 = arith.constant 2 : index
    %c4_89 = arith.constant 4 : index
    %52 = memref.load %arg3[%c2_88, %c4_89] : memref<4x12xf32, #tpu.memory_space<smem>>
    %c2_90 = arith.constant 2 : index
    %c5_91 = arith.constant 5 : index
    %53 = memref.load %arg3[%c2_90, %c5_91] : memref<4x12xf32, #tpu.memory_space<smem>>
    %c2_92 = arith.constant 2 : index
    %c6_93 = arith.constant 6 : index
    %54 = memref.load %arg3[%c2_92, %c6_93] : memref<4x12xf32, #tpu.memory_space<smem>>
    %c2_94 = arith.constant 2 : index
    %c7_95 = arith.constant 7 : index
    %55 = memref.load %arg3[%c2_94, %c7_95] : memref<4x12xf32, #tpu.memory_space<smem>>
    %c2_96 = arith.constant 2 : index
    %c8_97 = arith.constant 8 : index
    %56 = memref.load %arg3[%c2_96, %c8_97] : memref<4x12xf32, #tpu.memory_space<smem>>
    %c2_98 = arith.constant 2 : index
    %c9_99 = arith.constant 9 : index
    %57 = memref.load %arg3[%c2_98, %c9_99] : memref<4x12xf32, #tpu.memory_space<smem>>
    %c2_100 = arith.constant 2 : index
    %c10_101 = arith.constant 10 : index
    %58 = memref.load %arg3[%c2_100, %c10_101] : memref<4x12xf32, #tpu.memory_space<smem>>
    %c2_102 = arith.constant 2 : index
    %c11_103 = arith.constant 11 : index
    %59 = memref.load %arg3[%c2_102, %c11_103] : memref<4x12xf32, #tpu.memory_space<smem>>
    %c3_104 = arith.constant 3 : index
    %c0_105 = arith.constant 0 : index
    %60 = memref.load %arg3[%c3_104, %c0_105] : memref<4x12xf32, #tpu.memory_space<smem>>
    %c3_106 = arith.constant 3 : index
    %c1_107 = arith.constant 1 : index
    %61 = memref.load %arg3[%c3_106, %c1_107] : memref<4x12xf32, #tpu.memory_space<smem>>
    %c3_108 = arith.constant 3 : index
    %c2_109 = arith.constant 2 : index
    %62 = memref.load %arg3[%c3_108, %c2_109] : memref<4x12xf32, #tpu.memory_space<smem>>
    %c3_110 = arith.constant 3 : index
    %c3_111 = arith.constant 3 : index
    %63 = memref.load %arg3[%c3_110, %c3_111] : memref<4x12xf32, #tpu.memory_space<smem>>
    %c3_112 = arith.constant 3 : index
    %c4_113 = arith.constant 4 : index
    %64 = memref.load %arg3[%c3_112, %c4_113] : memref<4x12xf32, #tpu.memory_space<smem>>
    %c3_114 = arith.constant 3 : index
    %c5_115 = arith.constant 5 : index
    %65 = memref.load %arg3[%c3_114, %c5_115] : memref<4x12xf32, #tpu.memory_space<smem>>
    %c3_116 = arith.constant 3 : index
    %c6_117 = arith.constant 6 : index
    %66 = memref.load %arg3[%c3_116, %c6_117] : memref<4x12xf32, #tpu.memory_space<smem>>
    %c3_118 = arith.constant 3 : index
    %c7_119 = arith.constant 7 : index
    %67 = memref.load %arg3[%c3_118, %c7_119] : memref<4x12xf32, #tpu.memory_space<smem>>
    %c3_120 = arith.constant 3 : index
    %c8_121 = arith.constant 8 : index
    %68 = memref.load %arg3[%c3_120, %c8_121] : memref<4x12xf32, #tpu.memory_space<smem>>
    %c3_122 = arith.constant 3 : index
    %c9_123 = arith.constant 9 : index
    %69 = memref.load %arg3[%c3_122, %c9_123] : memref<4x12xf32, #tpu.memory_space<smem>>
    %c3_124 = arith.constant 3 : index
    %c10_125 = arith.constant 10 : index
    %70 = memref.load %arg3[%c3_124, %c10_125] : memref<4x12xf32, #tpu.memory_space<smem>>
    %c3_126 = arith.constant 3 : index
    %c11_127 = arith.constant 11 : index
    %71 = memref.load %arg3[%c3_126, %c11_127] : memref<4x12xf32, #tpu.memory_space<smem>>
    %c0_128 = arith.constant 0 : index
    %72 = memref.load %arg4[%c0_128] : memref<4xf32, #tpu.memory_space<smem>>
    %c1_129 = arith.constant 1 : index
    %73 = memref.load %arg4[%c1_129] : memref<4xf32, #tpu.memory_space<smem>>
    %c2_130 = arith.constant 2 : index
    %74 = memref.load %arg4[%c2_130] : memref<4xf32, #tpu.memory_space<smem>>
    %c3_131 = arith.constant 3 : index
    %75 = memref.load %arg4[%c3_131] : memref<4xf32, #tpu.memory_space<smem>>
    %c0_i32 = arith.constant 0 : i32
    %c1_i32 = arith.constant 1 : i32
    %76 = arith.muli %c0_i32, %c1_i32 : i32
    %c0_i32_132 = arith.constant 0 : i32
    %77 = arith.addi %c0_i32_132, %76 : i32
    %78 = arith.index_cast %77 : i32 to index
    %c0_133 = arith.constant 0 : index
    %c0_134 = arith.constant 0 : index
    %c0_135 = arith.constant 0 : index
    %79 = vector.load %arg5[%78, %c0_133, %c0_134, %c0_135] : memref<1x2x16x128xf32, #tpu.memory_space<vmem>>, vector<1x2x16x128xf32>
    %80 = vector.shape_cast %79 : vector<1x2x16x128xf32> to vector<2x16x128xf32>
    %81 = vector.extract_strided_slice %80 {offsets = [0, 0, 0], sizes = [2, 8, 128], strides = [1, 1, 1]} : vector<2x16x128xf32> to vector<2x8x128xf32>
    %82 = vector.extract_strided_slice %80 {offsets = [0, 8, 0], sizes = [2, 8, 128], strides = [1, 1, 1]} : vector<2x16x128xf32> to vector<2x8x128xf32>
    %83 = vector.extract_strided_slice %81 {offsets = [0, 0, 0], sizes = [2, 6, 128], strides = [1, 1, 1]} : vector<2x8x128xf32> to vector<2x6x128xf32>
    %84 = vector.extract_strided_slice %81 {offsets = [0, 1, 0], sizes = [2, 6, 128], strides = [1, 1, 1]} : vector<2x8x128xf32> to vector<2x6x128xf32>
    %85 = vector.extract_strided_slice %81 {offsets = [0, 2, 0], sizes = [2, 6, 128], strides = [1, 1, 1]} : vector<2x8x128xf32> to vector<2x6x128xf32>
    %86 = vector.extract_strided_slice %82 {offsets = [0, 0, 0], sizes = [2, 6, 128], strides = [1, 1, 1]} : vector<2x8x128xf32> to vector<2x6x128xf32>
    %87 = vector.extract_strided_slice %82 {offsets = [0, 1, 0], sizes = [2, 6, 128], strides = [1, 1, 1]} : vector<2x8x128xf32> to vector<2x6x128xf32>
    %88 = vector.extract_strided_slice %82 {offsets = [0, 2, 0], sizes = [2, 6, 128], strides = [1, 1, 1]} : vector<2x8x128xf32> to vector<2x6x128xf32>
    %89 = vector.broadcast %0 : f32 to vector<2x6x128xf32>
    %90 = arith.mulf %89, %83 : vector<2x6x128xf32>
    %91 = vector.broadcast %1 : f32 to vector<2x6x128xf32>
    %92 = arith.mulf %91, %86 : vector<2x6x128xf32>
    %93 = arith.addf %90, %92 : vector<2x6x128xf32>
    %94 = vector.broadcast %2 : f32 to vector<2x6x128xf32>
    %95 = arith.mulf %94, %84 : vector<2x6x128xf32>
    %96 = arith.addf %93, %95 : vector<2x6x128xf32>
    %97 = vector.broadcast %3 : f32 to vector<2x6x128xf32>
    %98 = arith.mulf %97, %87 : vector<2x6x128xf32>
    %99 = arith.addf %96, %98 : vector<2x6x128xf32>
    %100 = vector.broadcast %4 : f32 to vector<2x6x128xf32>
    %101 = arith.mulf %100, %85 : vector<2x6x128xf32>
    %102 = arith.addf %99, %101 : vector<2x6x128xf32>
    %103 = vector.broadcast %0 : f32 to vector<2x6x128xf32>
    %104 = arith.mulf %103, %86 : vector<2x6x128xf32>
    %105 = vector.broadcast %1 : f32 to vector<2x6x128xf32>
    %106 = arith.mulf %105, %84 : vector<2x6x128xf32>
    %107 = arith.addf %104, %106 : vector<2x6x128xf32>
    %108 = vector.broadcast %2 : f32 to vector<2x6x128xf32>
    %109 = arith.mulf %108, %87 : vector<2x6x128xf32>
    %110 = arith.addf %107, %109 : vector<2x6x128xf32>
    %111 = vector.broadcast %3 : f32 to vector<2x6x128xf32>
    %112 = arith.mulf %111, %85 : vector<2x6x128xf32>
    %113 = arith.addf %110, %112 : vector<2x6x128xf32>
    %114 = vector.broadcast %4 : f32 to vector<2x6x128xf32>
    %115 = arith.mulf %114, %88 : vector<2x6x128xf32>
    %116 = arith.addf %113, %115 : vector<2x6x128xf32>
    %117 = arith.maximumf %102, %116 : vector<2x6x128xf32>
    %118 = vector.broadcast %20 : f32 to vector<2x6x128xf32>
    %119 = arith.addf %117, %118 : vector<2x6x128xf32>
    %cst = arith.constant 0.000000e+00 : f32
    %120 = vector.broadcast %cst : f32 to vector<2x6x128xf32>
    %121 = arith.maximumf %119, %120 : vector<2x6x128xf32>
    %122 = vector.extract_strided_slice %121 {offsets = [0, 0, 0], sizes = [2, 4, 128], strides = [1, 1, 1]} : vector<2x6x128xf32> to vector<2x4x128xf32>
    %123 = vector.broadcast %24 : f32 to vector<2x4x128xf32>
    %124 = arith.mulf %123, %122 : vector<2x4x128xf32>
    %125 = vector.broadcast %36 : f32 to vector<2x4x128xf32>
    %126 = arith.mulf %125, %122 : vector<2x4x128xf32>
    %127 = vector.broadcast %48 : f32 to vector<2x4x128xf32>
    %128 = arith.mulf %127, %122 : vector<2x4x128xf32>
    %129 = vector.broadcast %60 : f32 to vector<2x4x128xf32>
    %130 = arith.mulf %129, %122 : vector<2x4x128xf32>
    %131 = vector.extract_strided_slice %121 {offsets = [0, 1, 0], sizes = [2, 4, 128], strides = [1, 1, 1]} : vector<2x6x128xf32> to vector<2x4x128xf32>
    %132 = vector.broadcast %25 : f32 to vector<2x4x128xf32>
    %133 = arith.mulf %132, %131 : vector<2x4x128xf32>
    %134 = arith.addf %124, %133 : vector<2x4x128xf32>
    %135 = vector.broadcast %37 : f32 to vector<2x4x128xf32>
    %136 = arith.mulf %135, %131 : vector<2x4x128xf32>
    %137 = arith.addf %126, %136 : vector<2x4x128xf32>
    %138 = vector.broadcast %49 : f32 to vector<2x4x128xf32>
    %139 = arith.mulf %138, %131 : vector<2x4x128xf32>
    %140 = arith.addf %128, %139 : vector<2x4x128xf32>
    %141 = vector.broadcast %61 : f32 to vector<2x4x128xf32>
    %142 = arith.mulf %141, %131 : vector<2x4x128xf32>
    %143 = arith.addf %130, %142 : vector<2x4x128xf32>
    %144 = vector.extract_strided_slice %121 {offsets = [0, 2, 0], sizes = [2, 4, 128], strides = [1, 1, 1]} : vector<2x6x128xf32> to vector<2x4x128xf32>
    %145 = vector.broadcast %26 : f32 to vector<2x4x128xf32>
    %146 = arith.mulf %145, %144 : vector<2x4x128xf32>
    %147 = arith.addf %134, %146 : vector<2x4x128xf32>
    %148 = vector.broadcast %38 : f32 to vector<2x4x128xf32>
    %149 = arith.mulf %148, %144 : vector<2x4x128xf32>
    %150 = arith.addf %137, %149 : vector<2x4x128xf32>
    %151 = vector.broadcast %50 : f32 to vector<2x4x128xf32>
    %152 = arith.mulf %151, %144 : vector<2x4x128xf32>
    %153 = arith.addf %140, %152 : vector<2x4x128xf32>
    %154 = vector.broadcast %62 : f32 to vector<2x4x128xf32>
    %155 = arith.mulf %154, %144 : vector<2x4x128xf32>
    %156 = arith.addf %143, %155 : vector<2x4x128xf32>
    %157 = vector.broadcast %5 : f32 to vector<2x6x128xf32>
    %158 = arith.mulf %157, %83 : vector<2x6x128xf32>
    %159 = vector.broadcast %6 : f32 to vector<2x6x128xf32>
    %160 = arith.mulf %159, %86 : vector<2x6x128xf32>
    %161 = arith.addf %158, %160 : vector<2x6x128xf32>
    %162 = vector.broadcast %7 : f32 to vector<2x6x128xf32>
    %163 = arith.mulf %162, %84 : vector<2x6x128xf32>
    %164 = arith.addf %161, %163 : vector<2x6x128xf32>
    %165 = vector.broadcast %8 : f32 to vector<2x6x128xf32>
    %166 = arith.mulf %165, %87 : vector<2x6x128xf32>
    %167 = arith.addf %164, %166 : vector<2x6x128xf32>
    %168 = vector.broadcast %9 : f32 to vector<2x6x128xf32>
    %169 = arith.mulf %168, %85 : vector<2x6x128xf32>
    %170 = arith.addf %167, %169 : vector<2x6x128xf32>
    %171 = vector.broadcast %5 : f32 to vector<2x6x128xf32>
    %172 = arith.mulf %171, %86 : vector<2x6x128xf32>
    %173 = vector.broadcast %6 : f32 to vector<2x6x128xf32>
    %174 = arith.mulf %173, %84 : vector<2x6x128xf32>
    %175 = arith.addf %172, %174 : vector<2x6x128xf32>
    %176 = vector.broadcast %7 : f32 to vector<2x6x128xf32>
    %177 = arith.mulf %176, %87 : vector<2x6x128xf32>
    %178 = arith.addf %175, %177 : vector<2x6x128xf32>
    %179 = vector.broadcast %8 : f32 to vector<2x6x128xf32>
    %180 = arith.mulf %179, %85 : vector<2x6x128xf32>
    %181 = arith.addf %178, %180 : vector<2x6x128xf32>
    %182 = vector.broadcast %9 : f32 to vector<2x6x128xf32>
    %183 = arith.mulf %182, %88 : vector<2x6x128xf32>
    %184 = arith.addf %181, %183 : vector<2x6x128xf32>
    %185 = arith.maximumf %170, %184 : vector<2x6x128xf32>
    %186 = vector.broadcast %21 : f32 to vector<2x6x128xf32>
    %187 = arith.addf %185, %186 : vector<2x6x128xf32>
    %cst_136 = arith.constant 0.000000e+00 : f32
    %188 = vector.broadcast %cst_136 : f32 to vector<2x6x128xf32>
    %189 = arith.maximumf %187, %188 : vector<2x6x128xf32>
    %190 = vector.extract_strided_slice %189 {offsets = [0, 0, 0], sizes = [2, 4, 128], strides = [1, 1, 1]} : vector<2x6x128xf32> to vector<2x4x128xf32>
    %191 = vector.broadcast %27 : f32 to vector<2x4x128xf32>
    %192 = arith.mulf %191, %190 : vector<2x4x128xf32>
    %193 = arith.addf %147, %192 : vector<2x4x128xf32>
    %194 = vector.broadcast %39 : f32 to vector<2x4x128xf32>
    %195 = arith.mulf %194, %190 : vector<2x4x128xf32>
    %196 = arith.addf %150, %195 : vector<2x4x128xf32>
    %197 = vector.broadcast %51 : f32 to vector<2x4x128xf32>
    %198 = arith.mulf %197, %190 : vector<2x4x128xf32>
    %199 = arith.addf %153, %198 : vector<2x4x128xf32>
    %200 = vector.broadcast %63 : f32 to vector<2x4x128xf32>
    %201 = arith.mulf %200, %190 : vector<2x4x128xf32>
    %202 = arith.addf %156, %201 : vector<2x4x128xf32>
    %203 = vector.extract_strided_slice %189 {offsets = [0, 1, 0], sizes = [2, 4, 128], strides = [1, 1, 1]} : vector<2x6x128xf32> to vector<2x4x128xf32>
    %204 = vector.broadcast %28 : f32 to vector<2x4x128xf32>
    %205 = arith.mulf %204, %203 : vector<2x4x128xf32>
    %206 = arith.addf %193, %205 : vector<2x4x128xf32>
    %207 = vector.broadcast %40 : f32 to vector<2x4x128xf32>
    %208 = arith.mulf %207, %203 : vector<2x4x128xf32>
    %209 = arith.addf %196, %208 : vector<2x4x128xf32>
    %210 = vector.broadcast %52 : f32 to vector<2x4x128xf32>
    %211 = arith.mulf %210, %203 : vector<2x4x128xf32>
    %212 = arith.addf %199, %211 : vector<2x4x128xf32>
    %213 = vector.broadcast %64 : f32 to vector<2x4x128xf32>
    %214 = arith.mulf %213, %203 : vector<2x4x128xf32>
    %215 = arith.addf %202, %214 : vector<2x4x128xf32>
    %216 = vector.extract_strided_slice %189 {offsets = [0, 2, 0], sizes = [2, 4, 128], strides = [1, 1, 1]} : vector<2x6x128xf32> to vector<2x4x128xf32>
    %217 = vector.broadcast %29 : f32 to vector<2x4x128xf32>
    %218 = arith.mulf %217, %216 : vector<2x4x128xf32>
    %219 = arith.addf %206, %218 : vector<2x4x128xf32>
    %220 = vector.broadcast %41 : f32 to vector<2x4x128xf32>
    %221 = arith.mulf %220, %216 : vector<2x4x128xf32>
    %222 = arith.addf %209, %221 : vector<2x4x128xf32>
    %223 = vector.broadcast %53 : f32 to vector<2x4x128xf32>
    %224 = arith.mulf %223, %216 : vector<2x4x128xf32>
    %225 = arith.addf %212, %224 : vector<2x4x128xf32>
    %226 = vector.broadcast %65 : f32 to vector<2x4x128xf32>
    %227 = arith.mulf %226, %216 : vector<2x4x128xf32>
    %228 = arith.addf %215, %227 : vector<2x4x128xf32>
    %229 = vector.broadcast %10 : f32 to vector<2x6x128xf32>
    %230 = arith.mulf %229, %83 : vector<2x6x128xf32>
    %231 = vector.broadcast %11 : f32 to vector<2x6x128xf32>
    %232 = arith.mulf %231, %86 : vector<2x6x128xf32>
    %233 = arith.addf %230, %232 : vector<2x6x128xf32>
    %234 = vector.broadcast %12 : f32 to vector<2x6x128xf32>
    %235 = arith.mulf %234, %84 : vector<2x6x128xf32>
    %236 = arith.addf %233, %235 : vector<2x6x128xf32>
    %237 = vector.broadcast %13 : f32 to vector<2x6x128xf32>
    %238 = arith.mulf %237, %87 : vector<2x6x128xf32>
    %239 = arith.addf %236, %238 : vector<2x6x128xf32>
    %240 = vector.broadcast %14 : f32 to vector<2x6x128xf32>
    %241 = arith.mulf %240, %85 : vector<2x6x128xf32>
    %242 = arith.addf %239, %241 : vector<2x6x128xf32>
    %243 = vector.broadcast %10 : f32 to vector<2x6x128xf32>
    %244 = arith.mulf %243, %86 : vector<2x6x128xf32>
    %245 = vector.broadcast %11 : f32 to vector<2x6x128xf32>
    %246 = arith.mulf %245, %84 : vector<2x6x128xf32>
    %247 = arith.addf %244, %246 : vector<2x6x128xf32>
    %248 = vector.broadcast %12 : f32 to vector<2x6x128xf32>
    %249 = arith.mulf %248, %87 : vector<2x6x128xf32>
    %250 = arith.addf %247, %249 : vector<2x6x128xf32>
    %251 = vector.broadcast %13 : f32 to vector<2x6x128xf32>
    %252 = arith.mulf %251, %85 : vector<2x6x128xf32>
    %253 = arith.addf %250, %252 : vector<2x6x128xf32>
    %254 = vector.broadcast %14 : f32 to vector<2x6x128xf32>
    %255 = arith.mulf %254, %88 : vector<2x6x128xf32>
    %256 = arith.addf %253, %255 : vector<2x6x128xf32>
    %257 = arith.maximumf %242, %256 : vector<2x6x128xf32>
    %258 = vector.broadcast %22 : f32 to vector<2x6x128xf32>
    %259 = arith.addf %257, %258 : vector<2x6x128xf32>
    %cst_137 = arith.constant 0.000000e+00 : f32
    %260 = vector.broadcast %cst_137 : f32 to vector<2x6x128xf32>
    %261 = arith.maximumf %259, %260 : vector<2x6x128xf32>
    %262 = vector.extract_strided_slice %261 {offsets = [0, 0, 0], sizes = [2, 4, 128], strides = [1, 1, 1]} : vector<2x6x128xf32> to vector<2x4x128xf32>
    %263 = vector.broadcast %30 : f32 to vector<2x4x128xf32>
    %264 = arith.mulf %263, %262 : vector<2x4x128xf32>
    %265 = arith.addf %219, %264 : vector<2x4x128xf32>
    %266 = vector.broadcast %42 : f32 to vector<2x4x128xf32>
    %267 = arith.mulf %266, %262 : vector<2x4x128xf32>
    %268 = arith.addf %222, %267 : vector<2x4x128xf32>
    %269 = vector.broadcast %54 : f32 to vector<2x4x128xf32>
    %270 = arith.mulf %269, %262 : vector<2x4x128xf32>
    %271 = arith.addf %225, %270 : vector<2x4x128xf32>
    %272 = vector.broadcast %66 : f32 to vector<2x4x128xf32>
    %273 = arith.mulf %272, %262 : vector<2x4x128xf32>
    %274 = arith.addf %228, %273 : vector<2x4x128xf32>
    %275 = vector.extract_strided_slice %261 {offsets = [0, 1, 0], sizes = [2, 4, 128], strides = [1, 1, 1]} : vector<2x6x128xf32> to vector<2x4x128xf32>
    %276 = vector.broadcast %31 : f32 to vector<2x4x128xf32>
    %277 = arith.mulf %276, %275 : vector<2x4x128xf32>
    %278 = arith.addf %265, %277 : vector<2x4x128xf32>
    %279 = vector.broadcast %43 : f32 to vector<2x4x128xf32>
    %280 = arith.mulf %279, %275 : vector<2x4x128xf32>
    %281 = arith.addf %268, %280 : vector<2x4x128xf32>
    %282 = vector.broadcast %55 : f32 to vector<2x4x128xf32>
    %283 = arith.mulf %282, %275 : vector<2x4x128xf32>
    %284 = arith.addf %271, %283 : vector<2x4x128xf32>
    %285 = vector.broadcast %67 : f32 to vector<2x4x128xf32>
    %286 = arith.mulf %285, %275 : vector<2x4x128xf32>
    %287 = arith.addf %274, %286 : vector<2x4x128xf32>
    %288 = vector.extract_strided_slice %261 {offsets = [0, 2, 0], sizes = [2, 4, 128], strides = [1, 1, 1]} : vector<2x6x128xf32> to vector<2x4x128xf32>
    %289 = vector.broadcast %32 : f32 to vector<2x4x128xf32>
    %290 = arith.mulf %289, %288 : vector<2x4x128xf32>
    %291 = arith.addf %278, %290 : vector<2x4x128xf32>
    %292 = vector.broadcast %44 : f32 to vector<2x4x128xf32>
    %293 = arith.mulf %292, %288 : vector<2x4x128xf32>
    %294 = arith.addf %281, %293 : vector<2x4x128xf32>
    %295 = vector.broadcast %56 : f32 to vector<2x4x128xf32>
    %296 = arith.mulf %295, %288 : vector<2x4x128xf32>
    %297 = arith.addf %284, %296 : vector<2x4x128xf32>
    %298 = vector.broadcast %68 : f32 to vector<2x4x128xf32>
    %299 = arith.mulf %298, %288 : vector<2x4x128xf32>
    %300 = arith.addf %287, %299 : vector<2x4x128xf32>
    %301 = vector.broadcast %15 : f32 to vector<2x6x128xf32>
    %302 = arith.mulf %301, %83 : vector<2x6x128xf32>
    %303 = vector.broadcast %16 : f32 to vector<2x6x128xf32>
    %304 = arith.mulf %303, %86 : vector<2x6x128xf32>
    %305 = arith.addf %302, %304 : vector<2x6x128xf32>
    %306 = vector.broadcast %17 : f32 to vector<2x6x128xf32>
    %307 = arith.mulf %306, %84 : vector<2x6x128xf32>
    %308 = arith.addf %305, %307 : vector<2x6x128xf32>
    %309 = vector.broadcast %18 : f32 to vector<2x6x128xf32>
    %310 = arith.mulf %309, %87 : vector<2x6x128xf32>
    %311 = arith.addf %308, %310 : vector<2x6x128xf32>
    %312 = vector.broadcast %19 : f32 to vector<2x6x128xf32>
    %313 = arith.mulf %312, %85 : vector<2x6x128xf32>
    %314 = arith.addf %311, %313 : vector<2x6x128xf32>
    %315 = vector.broadcast %15 : f32 to vector<2x6x128xf32>
    %316 = arith.mulf %315, %86 : vector<2x6x128xf32>
    %317 = vector.broadcast %16 : f32 to vector<2x6x128xf32>
    %318 = arith.mulf %317, %84 : vector<2x6x128xf32>
    %319 = arith.addf %316, %318 : vector<2x6x128xf32>
    %320 = vector.broadcast %17 : f32 to vector<2x6x128xf32>
    %321 = arith.mulf %320, %87 : vector<2x6x128xf32>
    %322 = arith.addf %319, %321 : vector<2x6x128xf32>
    %323 = vector.broadcast %18 : f32 to vector<2x6x128xf32>
    %324 = arith.mulf %323, %85 : vector<2x6x128xf32>
    %325 = arith.addf %322, %324 : vector<2x6x128xf32>
    %326 = vector.broadcast %19 : f32 to vector<2x6x128xf32>
    %327 = arith.mulf %326, %88 : vector<2x6x128xf32>
    %328 = arith.addf %325, %327 : vector<2x6x128xf32>
    %329 = arith.maximumf %314, %328 : vector<2x6x128xf32>
    %330 = vector.broadcast %23 : f32 to vector<2x6x128xf32>
    %331 = arith.addf %329, %330 : vector<2x6x128xf32>
    %cst_138 = arith.constant 0.000000e+00 : f32
    %332 = vector.broadcast %cst_138 : f32 to vector<2x6x128xf32>
    %333 = arith.maximumf %331, %332 : vector<2x6x128xf32>
    %334 = vector.extract_strided_slice %333 {offsets = [0, 0, 0], sizes = [2, 4, 128], strides = [1, 1, 1]} : vector<2x6x128xf32> to vector<2x4x128xf32>
    %335 = vector.broadcast %33 : f32 to vector<2x4x128xf32>
    %336 = arith.mulf %335, %334 : vector<2x4x128xf32>
    %337 = arith.addf %291, %336 : vector<2x4x128xf32>
    %338 = vector.broadcast %45 : f32 to vector<2x4x128xf32>
    %339 = arith.mulf %338, %334 : vector<2x4x128xf32>
    %340 = arith.addf %294, %339 : vector<2x4x128xf32>
    %341 = vector.broadcast %57 : f32 to vector<2x4x128xf32>
    %342 = arith.mulf %341, %334 : vector<2x4x128xf32>
    %343 = arith.addf %297, %342 : vector<2x4x128xf32>
    %344 = vector.broadcast %69 : f32 to vector<2x4x128xf32>
    %345 = arith.mulf %344, %334 : vector<2x4x128xf32>
    %346 = arith.addf %300, %345 : vector<2x4x128xf32>
    %347 = vector.extract_strided_slice %333 {offsets = [0, 1, 0], sizes = [2, 4, 128], strides = [1, 1, 1]} : vector<2x6x128xf32> to vector<2x4x128xf32>
    %348 = vector.broadcast %34 : f32 to vector<2x4x128xf32>
    %349 = arith.mulf %348, %347 : vector<2x4x128xf32>
    %350 = arith.addf %337, %349 : vector<2x4x128xf32>
    %351 = vector.broadcast %46 : f32 to vector<2x4x128xf32>
    %352 = arith.mulf %351, %347 : vector<2x4x128xf32>
    %353 = arith.addf %340, %352 : vector<2x4x128xf32>
    %354 = vector.broadcast %58 : f32 to vector<2x4x128xf32>
    %355 = arith.mulf %354, %347 : vector<2x4x128xf32>
    %356 = arith.addf %343, %355 : vector<2x4x128xf32>
    %357 = vector.broadcast %70 : f32 to vector<2x4x128xf32>
    %358 = arith.mulf %357, %347 : vector<2x4x128xf32>
    %359 = arith.addf %346, %358 : vector<2x4x128xf32>
    %360 = vector.extract_strided_slice %333 {offsets = [0, 2, 0], sizes = [2, 4, 128], strides = [1, 1, 1]} : vector<2x6x128xf32> to vector<2x4x128xf32>
    %361 = vector.broadcast %35 : f32 to vector<2x4x128xf32>
    %362 = arith.mulf %361, %360 : vector<2x4x128xf32>
    %363 = arith.addf %350, %362 : vector<2x4x128xf32>
    %364 = vector.broadcast %47 : f32 to vector<2x4x128xf32>
    %365 = arith.mulf %364, %360 : vector<2x4x128xf32>
    %366 = arith.addf %353, %365 : vector<2x4x128xf32>
    %367 = vector.broadcast %59 : f32 to vector<2x4x128xf32>
    %368 = arith.mulf %367, %360 : vector<2x4x128xf32>
    %369 = arith.addf %356, %368 : vector<2x4x128xf32>
    %370 = vector.broadcast %71 : f32 to vector<2x4x128xf32>
    %371 = arith.mulf %370, %360 : vector<2x4x128xf32>
    %372 = arith.addf %359, %371 : vector<2x4x128xf32>
    %373 = vector.broadcast %72 : f32 to vector<2x4x128xf32>
    %374 = arith.addf %363, %373 : vector<2x4x128xf32>
    %cst_139 = arith.constant 0.000000e+00 : f32
    %375 = vector.broadcast %cst_139 : f32 to vector<2x4x128xf32>
    %376 = arith.maximumf %374, %375 : vector<2x4x128xf32>
    %377 = vector.broadcast %73 : f32 to vector<2x4x128xf32>
    %378 = arith.addf %366, %377 : vector<2x4x128xf32>
    %cst_140 = arith.constant 0.000000e+00 : f32
    %379 = vector.broadcast %cst_140 : f32 to vector<2x4x128xf32>
    %380 = arith.maximumf %378, %379 : vector<2x4x128xf32>
    %381 = arith.maximumf %376, %380 : vector<2x4x128xf32>
    %382 = vector.broadcast %74 : f32 to vector<2x4x128xf32>
    %383 = arith.addf %369, %382 : vector<2x4x128xf32>
    %cst_141 = arith.constant 0.000000e+00 : f32
    %384 = vector.broadcast %cst_141 : f32 to vector<2x4x128xf32>
    %385 = arith.maximumf %383, %384 : vector<2x4x128xf32>
    %386 = arith.maximumf %381, %385 : vector<2x4x128xf32>
    %387 = vector.broadcast %75 : f32 to vector<2x4x128xf32>
    %388 = arith.addf %372, %387 : vector<2x4x128xf32>
    %cst_142 = arith.constant 0.000000e+00 : f32
    %389 = vector.broadcast %cst_142 : f32 to vector<2x4x128xf32>
    %390 = arith.maximumf %388, %389 : vector<2x4x128xf32>
    %391 = arith.maximumf %386, %390 : vector<2x4x128xf32>
    %cst_143 = arith.constant dense<0xFF800000> : vector<2x128xf32>
    %392 = vector.multi_reduction <maximumf>, %391, %cst_143 [1] : vector<2x4x128xf32> to vector<2x128xf32>
    %393 = arith.index_cast %77 : i32 to index
    %c0_144 = arith.constant 0 : index
    %c0_145 = arith.constant 0 : index
    %394 = vector.load %arg6[%393, %c0_144, %c0_145] : memref<1x2x128xf32, #tpu.memory_space<vmem>>, vector<1x2x128xf32>
    %395 = vector.shape_cast %394 : vector<1x2x128xf32> to vector<2x128xf32>
    %396 = vector.shape_cast %392 : vector<2x128xf32> to vector<1x2x128xf32>
    tpu.vector_store %arg6[%393, %c0_144, %c0_145], %396 {strides = array<i32>} : memref<1x2x128xf32, #tpu.memory_space<vmem>>, vector<1x2x128xf32>,
    %c1_i32_146 = arith.constant 1 : i32
    return
  }
  func.func @transform_0(%arg0: i32) -> (i32, i32) {
    %c0_i32 = arith.constant 0 : i32
    %c0_i32_0 = arith.constant 0 : i32
    %c0_i32_1 = arith.constant 0 : i32
    return %c0_i32, %c0_i32_0 : i32, i32
  }
  func.func @transform_1(%arg0: i32) -> i32 {
    %c0_i32 = arith.constant 0 : i32
    %c0_i32_0 = arith.constant 0 : i32
    return %c0_i32 : i32
  }
  func.func @transform_2(%arg0: i32) -> (i32, i32) {
    %c0_i32 = arith.constant 0 : i32
    %c0_i32_0 = arith.constant 0 : i32
    %c0_i32_1 = arith.constant 0 : i32
    return %c0_i32, %c0_i32_0 : i32, i32
  }
  func.func @transform_3(%arg0: i32) -> i32 {
    %c0_i32 = arith.constant 0 : i32
    %c0_i32_0 = arith.constant 0 : i32
    return %c0_i32 : i32
  }
  func.func @transform_4(%arg0: i32) -> (i32, i32, i32, i32) {
    %c0_i32 = arith.constant 0 : i32
    %c0_i32_0 = arith.constant 0 : i32
    %c0_i32_1 = arith.constant 0 : i32
    %c0_i32_2 = arith.constant 0 : i32
    return %arg0, %c0_i32, %c0_i32_0, %c0_i32_1 : i32, i32, i32, i32
  }
  func.func @transform_5(%arg0: i32) -> (i32, i32, i32) {
    %c0_i32 = arith.constant 0 : i32
    %c0_i32_0 = arith.constant 0 : i32
    %c0_i32_1 = arith.constant 0 : i32
    return %arg0, %c0_i32, %c0_i32_0 : i32, i32, i32
  }
}

</mosaic_0001>

<llo_original>
// kernel: tpu_custom_call.1
$region0: #{tpu_custom_call.1}
  #allocation0 [shape = 'u32[]', space=smem, size = 0x4, offset = 0x4, fixed_abs, tag = 'smem constant byte address 0x4 - core index']
  #allocation1 [shape = 'u32[72,128]{1,0:T(1,128)}', space=vmem, size = 0x9000, scoped, tag = 'internal scratch']
  %s0 = inlined_call_operand.hbm [shape: f32[4,5], index: 0, kind: input, shape index: {}]
  %s1 = inlined_call_operand.hbm [shape: f32[4], index: 1, kind: input, shape index: {}]
  %s2 = inlined_call_operand.hbm [shape: f32[4,12], index: 2, kind: input, shape index: {}]
  %s3 = inlined_call_operand.vmem [shape: f32[4], index: 3, kind: input, shape index: {}]
  %s4 = inlined_call_operand.hbm [shape: f32[2,2,16,128], index: 4, kind: input, shape index: {}]
  %s5 = inlined_call_operand.hbm [shape: f32[2,2,128], index: 5, kind: output, shape index: {}]
  %s6 = sld [smem:[#allocation0]]
  $region73: #{tpu_custom_call.1} parent=0
    _
  %s8 = ssub.s32 1, %s6
  %s9 = scalar_select 0, %s8, %s6
  $region1: #{tpu_custom_call.1} parent=0
    #allocation2 [shape = 'u8[2048]{0}', space=smem, size = 0x800, scoped, tag = 'input window, operand 0, single buffered']
    #allocation3 [shape = 's32[2]{0}', space=sflag, size = 0x8, scoped, tag = 'scoped memory for tpu_custom_call.1']
    #allocation4 [shape = 's32[2]{0}', space=sflag, size = 0x8, scoped, tag = 'scoped memory for tpu_custom_call.1']
    #allocation5 [shape = 's32[2]{0}', space=sflag, size = 0x8, scoped, tag = 'scoped memory for tpu_custom_call.1']
    #allocation6 [shape = 's32[2]{0}', space=sflag, size = 0x8, scoped, tag = 'scoped memory for tpu_custom_call.1']
    #allocation7 [shape = 'u8[512]{0}', space=smem, size = 0x200, scoped, tag = 'input window, operand 1, single buffered']
    #allocation8 [shape = 's32[1]{0}', space=sflag, size = 0x4, scoped, tag = 'scoped memory for tpu_custom_call.1']
    #allocation9 [shape = 'u8[2048]{0}', space=smem, size = 0x800, scoped, tag = 'input window, operand 2, single buffered']
    #allocation10 [shape = 'u8[512]{0}', space=smem, size = 0x200, scoped, tag = 'input window, operand 3, single buffered']
    #allocation11 [shape = 'u8[32768]{0}', space=vmem, size = 0x8000, scoped, tag = 'input window, operand 4']
    #allocation12 [shape = 'u8[2048]{0}', space=vmem, size = 0x800, scoped, tag = 'output window, operand 0']
    %10 = vsyncpa [#allocation5], 0
    %11 = vsyncpa [#allocation8], 0
    %12 = vsyncpa [#allocation6], 0
    %13 = vsyncpa [#allocation3], 0
    %s14 = scalar_lea.sflag [#allocation3], 1
    %15 = vsyncpa %s14, 0
    %16 = vsyncpa [#allocation4], 0
    %s17 = scalar_lea.sflag [#allocation4], 1
    %18 = vsyncpa %s17, 0
    loop: start=0, step=1, limit=4
    $region2: #{tpu_custom_call.1} parent=1 // loop_pre_header
      _
    $region3: #{tpu_custom_call.1} parent=1 // loop_header
      %s20 = sphi 0, %s24
      %p21 = scmp.ge.s32.totalorder %s20, 4
      %s28 = sphi 0, %s28
      %s30 = sphi 0, %s28
      %s31 = sphi 0, %s30
      %s45 = sphi 0, %s31
      %s49 = sphi 0, %s49
      %s51 = sphi 0, %s49
      %s52 = sphi 0, %s51
      %s66 = sphi 0, %s52
      %s70 = sphi 0, %s70
      %s72 = sphi 0, %s70
      %s73 = sphi 0, %s72
      %s87 = sphi 0, %s73
      %s91 = sphi 0, %s91
      %s93 = sphi 0, %s91
      %s94 = sphi 0, %s93
      %s108 = sphi 0, %s94
      %s114 = sphi 0, %s116
      %s117 = sphi 0, %s114
      %s118 = sphi 0, %s117
      %s134 = sphi 0, %s118
      %s140 = sphi 0, %s142
      %s143 = sphi 0, %s140
      %s144 = sphi 0, %s143
      %s160 = sphi 0, %s144
    $region4: #{tpu_custom_call.1} parent=1 // loop_header_branch
      %23 = sbr.rel (%p21) target = $region8
    $region5: #{tpu_custom_call.1} parent=1 // loop_body
      %s25 = ssub.s32 %s20, 1
      %s26 = ssub.s32 %s20, 2
      %s27 = sadd.s32 %s20, 1
      %s29 = sadd.s32 %s28, 1
      %p32 = scmp.eq.s32.totalorder %s20, 1
      %p33 = scmp.ne.s32.totalorder %s28, %s30
      %p34 = scmp.eq.s32.totalorder %s20, 0
      %p35 = por %p33, %p34
      %p36 = scmp.ne.s32.totalorder %s28, %s30
      %p37 = scmp.eq.s32.totalorder %s25, 1
      %p38 = por %p36, %p37
      %p39 = scmp.ne.s32.totalorder %s30, %s31
      %p40 = scmp.eq.s32.totalorder %s25, 0
      %p41 = por %p39, %p40
      %p42 = scmp.ne.s32.totalorder %s30, %s31
      %p43 = scmp.eq.s32.totalorder %s26, 1
      %p44 = por %p42, %p43
      %p46 = scmp.ne.s32.totalorder %s31, %s45
      %p47 = scmp.eq.s32.totalorder %s26, 0
      %p48 = por %p46, %p47
      %s50 = sadd.s32 %s49, 1
      %p53 = scmp.eq.s32.totalorder %s20, 1
      %p54 = scmp.ne.s32.totalorder %s49, %s51
      %p55 = scmp.eq.s32.totalorder %s20, 0
      %p56 = por %p54, %p55
      %p57 = scmp.ne.s32.totalorder %s49, %s51
      %p58 = scmp.eq.s32.totalorder %s25, 1
      %p59 = por %p57, %p58
      %p60 = scmp.ne.s32.totalorder %s51, %s52
      %p61 = scmp.eq.s32.totalorder %s25, 0
      %p62 = por %p60, %p61
      %p63 = scmp.ne.s32.totalorder %s51, %s52
      %p64 = scmp.eq.s32.totalorder %s26, 1
      %p65 = por %p63, %p64
      %p67 = scmp.ne.s32.totalorder %s52, %s66
      %p68 = scmp.eq.s32.totalorder %s26, 0
      %p69 = por %p67, %p68
      %s71 = sadd.s32 %s70, 1
      %p74 = scmp.eq.s32.totalorder %s20, 1
      %p75 = scmp.ne.s32.totalorder %s70, %s72
      %p76 = scmp.eq.s32.totalorder %s20, 0
      %p77 = por %p75, %p76
      %p78 = scmp.ne.s32.totalorder %s70, %s72
      %p79 = scmp.eq.s32.totalorder %s25, 1
      %p80 = por %p78, %p79
      %p81 = scmp.ne.s32.totalorder %s72, %s73
      %p82 = scmp.eq.s32.totalorder %s25, 0
      %p83 = por %p81, %p82
      %p84 = scmp.ne.s32.totalorder %s72, %s73
      %p85 = scmp.eq.s32.totalorder %s26, 1
      %p86 = por %p84, %p85
      %p88 = scmp.ne.s32.totalorder %s73, %s87
      %p89 = scmp.eq.s32.totalorder %s26, 0
      %p90 = por %p88, %p89
      %s92 = sadd.s32 %s91, 1
      %p95 = scmp.eq.s32.totalorder %s20, 1
      %p96 = scmp.ne.s32.totalorder %s91, %s93
      %p97 = scmp.eq.s32.totalorder %s20, 0
      %p98 = por %p96, %p97
      %p99 = scmp.ne.s32.totalorder %s91, %s93
      %p100 = scmp.eq.s32.totalorder %s25, 1
      %p101 = por %p99, %p100
      %p102 = scmp.ne.s32.totalorder %s93, %s94
      %p103 = scmp.eq.s32.totalorder %s25, 0
      %p104 = por %p102, %p103
      %p105 = scmp.ne.s32.totalorder %s93, %s94
      %p106 = scmp.eq.s32.totalorder %s26, 1
      %p107 = por %p105, %p106
      %p109 = scmp.ne.s32.totalorder %s94, %s108
      %p110 = scmp.eq.s32.totalorder %s26, 0
      %p111 = por %p109, %p110
      %s112 = ssub.s32 %s20, %s27
      %p113 = scmp.eq.s32.totalorder %s112, 0
      %s115 = sadd.s32 %s114, 1
      %s116 = scalar_select %p113, %s114, %s115
      %p119 = pneg %p113
      %p120 = scmp.eq.s32.totalorder %s20, 1
      %p121 = por %p119, %p120
      %p122 = scmp.ne.s32.totalorder %s114, %s117
      %p123 = scmp.eq.s32.totalorder %s20, 0
      %p124 = por %p122, %p123
      %p125 = scmp.ne.s32.totalorder %s114, %s117
      %p126 = scmp.eq.s32.totalorder %s25, 1
      %p127 = por %p125, %p126
      %p128 = scmp.ne.s32.totalorder %s117, %s118
      %p129 = scmp.eq.s32.totalorder %s25, 0
      %p130 = por %p128, %p129
      %p131 = scmp.ne.s32.totalorder %s117, %s118
      %p132 = scmp.eq.s32.totalorder %s26, 1
      %p133 = por %p131, %p132
      %p135 = scmp.ne.s32.totalorder %s118, %s134
      %p136 = scmp.eq.s32.totalorder %s26, 0
      %p137 = por %p135, %p136
      %s138 = ssub.s32 %s20, %s27
      %p139 = scmp.eq.s32.totalorder %s138, 0
      %s141 = sadd.s32 %s140, 1
      %s142 = scalar_select %p139, %s140, %s141
      %p145 = pneg %p139
      %p146 = scmp.eq.s32.totalorder %s20, 1
      %p147 = por %p145, %p146
      %p148 = scmp.ne.s32.totalorder %s140, %s143
      %p149 = scmp.eq.s32.totalorder %s20, 0
      %p150 = por %p148, %p149
      %p151 = scmp.ne.s32.totalorder %s140, %s143
      %p152 = scmp.eq.s32.totalorder %s25, 1
      %p153 = por %p151, %p152
      %p154 = scmp.ne.s32.totalorder %s143, %s144
      %p155 = scmp.eq.s32.totalorder %s25, 0
      %p156 = por %p154, %p155
      %p157 = scmp.ne.s32.totalorder %s143, %s144
      %p158 = scmp.eq.s32.totalorder %s26, 1
      %p159 = por %p157, %p158
      %p161 = scmp.ne.s32.totalorder %s144, %s160
      %p162 = scmp.eq.s32.totalorder %s26, 0
      %p163 = por %p161, %p162
      %p164 = scmp.le.s32.totalorder 1, %s20
      %p165 = scmp.lt.s32.totalorder %s20, 3
      %p166 = pnand %p164, %p165
      %p167 = pneg %p166
      // Predicated region
      $region9: #{tpu_custom_call.1} parent=5 // pred_check
        _
      $region10: #{tpu_custom_call.1} parent=5 // pred_check_branch
        %169 = sbr.rel (%p166) target = $region12
      $region11: #{tpu_custom_call.1} parent=5 // pred_region
        %s170 = ssub.s32 %s20, 1
        // Predicated region
        $region13: #{tpu_custom_call.1} parent=11 // pred_check
          %p171 = pneg %p41
        $region14: #{tpu_custom_call.1} parent=11 // pred_check_branch
          %173 = sbr.rel (%p171) target = $region16
        $region15: #{tpu_custom_call.1} parent=11 // pred_region
          %175 = vsyncadd [#allocation5], 0
          %s177 = sshll.u32 %s0, 4
          %s178 = int_to_ptr.hbm [resolvable:$true] %s177
          %180 = dma.hbm_to_smem %s178, 64, [#allocation2], [#allocation5]
        $region16: #{tpu_custom_call.1} parent=11 // pred_fallthru
          _
        // Predicated region
        $region17: #{tpu_custom_call.1} parent=11 // pred_check
          %p181 = pneg %p62
        $region18: #{tpu_custom_call.1} parent=11 // pred_check_branch
          %183 = sbr.rel (%p181) target = $region20
        $region19: #{tpu_custom_call.1} parent=11 // pred_region
          %185 = vsyncadd [#allocation8], 0
          %s187 = sshll.u32 %s1, 4
          %s188 = int_to_ptr.hbm [resolvable:$true] %s187
          %190 = dma.hbm_to_smem %s188, 16, [#allocation7], [#allocation8]
        $region20: #{tpu_custom_call.1} parent=11 // pred_fallthru
          _
        // Predicated region
        $region21: #{tpu_custom_call.1} parent=11 // pred_check
          %p191 = pneg %p83
        $region22: #{tpu_custom_call.1} parent=11 // pred_check_branch
          %193 = sbr.rel (%p191) target = $region24
        $region23: #{tpu_custom_call.1} parent=11 // pred_region
          %195 = vsyncadd [#allocation8], 0
          %s197 = sshll.u32 %s2, 4
          %s198 = int_to_ptr.hbm [resolvable:$true] %s197
          %200 = dma.hbm_to_smem %s198, 64, [#allocation9], [#allocation8]
        $region24: #{tpu_custom_call.1} parent=11 // pred_fallthru
          _
        // Predicated region
        $region25: #{tpu_custom_call.1} parent=11 // pred_check
          %p201 = pneg %p104
        $region26: #{tpu_custom_call.1} parent=11 // pred_check_branch
          %203 = sbr.rel (%p201) target = $region28
        $region27: #{tpu_custom_call.1} parent=11 // pred_region
          %205 = vsyncadd [#allocation6], 0
          %s207 = sshll.u32 %s3, 4
          %s208 = int_to_ptr.vmem [resolvable:$true] %s207
          %210 = dma.vmem_to_smem %s208, 16, [#allocation10], [#allocation6]
        $region28: #{tpu_custom_call.1} parent=11 // pred_fallthru
          _
      $region12: #{tpu_custom_call.1} parent=5 // pred_fallthru
        _
      %p211 = scmp.lt.s32.totalorder %s20, 2
      // Predicated region
      $region29: #{tpu_custom_call.1} parent=5 // pred_check
        %p212 = pneg %p211
      $region30: #{tpu_custom_call.1} parent=5 // pred_check_branch
        %214 = sbr.rel (%p212) target = $region32
      $region31: #{tpu_custom_call.1} parent=5 // pred_region
        // Predicated region
        $region33: #{tpu_custom_call.1} parent=31 // pred_check
          %p215 = pneg %p124
        $region34: #{tpu_custom_call.1} parent=31 // pred_check_branch
          %217 = sbr.rel (%p215) target = $region36
        $region35: #{tpu_custom_call.1} parent=31 // pred_region
          %s218 = sand.u32 %s114, 1
          %s219 = scalar_lea.sflag [#allocation3], %s218
          %s220 = sand.u32 %s114, 1
          %s221 = smul.addr %s220, 32
          %s222 = scalar_lea.vmem [#allocation11], %s221
          %224 = vsyncadd %s219, 0
          %s225 = smul.addr %s20, 4
          %s226 = smul.addr %s225, 8
          %s227 = scalar_lea.hbm %s4, %s226
          %s228 = sshll.u32 %s227, 4
          %s229 = int_to_ptr.hbm [resolvable:$true] %s228
          %s230 = sshll.u32 %s222, 4
          %s231 = int_to_ptr.vmem [resolvable:$true] %s230
          %236 = dma.hbm_to_vmem [thread:$0]  %s229, 512, %s231, %s219, 128, 128, 8
        $region36: #{tpu_custom_call.1} parent=31 // pred_fallthru
          _
      $region32: #{tpu_custom_call.1} parent=5 // pred_fallthru
        _
      %p237 = scmp.le.s32.totalorder 1, %s20
      %p238 = scmp.lt.s32.totalorder %s20, 3
      %p239 = pnand %p237, %p238
      %p240 = pneg %p239
      // Predicated region
      $region37: #{tpu_custom_call.1} parent=5 // pred_check
        _
      $region38: #{tpu_custom_call.1} parent=5 // pred_check_branch
        %242 = sbr.rel (%p239) target = $region40
      $region39: #{tpu_custom_call.1} parent=5 // pred_region
        %s243 = ssub.s32 %s20, 1
        // Predicated region
        $region41: #{tpu_custom_call.1} parent=39 // pred_check
          %p244 = pneg %p41
        $region42: #{tpu_custom_call.1} parent=39 // pred_check_branch
          %246 = sbr.rel (%p244) target = $region44
        $region43: #{tpu_custom_call.1} parent=39 // pred_region
          %248 = dma.done [#allocation5], 64
        $region44: #{tpu_custom_call.1} parent=39 // pred_fallthru
          _
        // Predicated region
        $region45: #{tpu_custom_call.1} parent=39 // pred_check
          %p249 = pneg %p62
        $region46: #{tpu_custom_call.1} parent=39 // pred_check_branch
          %251 = sbr.rel (%p249) target = $region48
        $region47: #{tpu_custom_call.1} parent=39 // pred_region
          %253 = dma.done [#allocation8], 16
        $region48: #{tpu_custom_call.1} parent=39 // pred_fallthru
          _
        // Predicated region
        $region49: #{tpu_custom_call.1} parent=39 // pred_check
          %p254 = pneg %p83
        $region50: #{tpu_custom_call.1} parent=39 // pred_check_branch
          %256 = sbr.rel (%p254) target = $region52
        $region51: #{tpu_custom_call.1} parent=39 // pred_region
          %258 = dma.done [#allocation8], 64
        $region52: #{tpu_custom_call.1} parent=39 // pred_fallthru
          _
        // Predicated region
        $region53: #{tpu_custom_call.1} parent=39 // pred_check
          %p259 = pneg %p104
        $region54: #{tpu_custom_call.1} parent=39 // pred_check_branch
          %261 = sbr.rel (%p259) target = $region56
        $region55: #{tpu_custom_call.1} parent=39 // pred_region
          %263 = dma.done [#allocation6], 16
        $region56: #{tpu_custom_call.1} parent=39 // pred_fallthru
          _
        %s264 = sand.u32 %s117, 1
        %s265 = scalar_lea.sflag [#allocation3], %s264
        %s266 = sand.u32 %s117, 1
        %s267 = smul.addr %s266, 32
        %s268 = scalar_lea.vmem [#allocation11], %s267
        // Predicated region
        $region57: #{tpu_custom_call.1} parent=39 // pred_check
          %p269 = pneg %p130
        $region58: #{tpu_custom_call.1} parent=39 // pred_check_branch
          %271 = sbr.rel (%p269) target = $region60
        $region59: #{tpu_custom_call.1} parent=39 // pred_region
          %273 = dma.done %s265, 512
        $region60: #{tpu_custom_call.1} parent=39 // pred_fallthru
          _
        %274 = sfence
        %p275 = pneg %p41
        %p276 = pneg %p38
        %p277 = pneg %p62
        %p278 = pneg %p59
        %p279 = pneg %p83
        %p280 = pneg %p80
        %p281 = pneg %p104
        %p282 = pneg %p101
        %s283 = sand.u32 %s117, 1
        %s284 = scalar_lea.sflag [#allocation3], %s283
        %s285 = sand.u32 %s117, 1
        %s286 = smul.addr %s285, 32
        %s287 = scalar_lea.vmem [#allocation11], %s286
        %p288 = pneg %p130
        %p289 = pneg %p127
        %p290 = pneg %p156
        %p291 = pneg %p153
        %s292 = sand.u32 %s143, 1
        %s293 = scalar_lea.sflag [#allocation4], %s292
        %s294 = sand.u32 %s143, 1
        %s295 = smul.addr %s294, 2
        %s296 = scalar_lea.vmem [#allocation12], %s295
        %s297 = sld [smem:[#allocation2]]
        %s298 = sld [smem:[#allocation2 + $0x1]]
        %s299 = sld [smem:[#allocation2 + $0x2]]
        %s300 = sld [smem:[#allocation2 + $0x3]]
        %s301 = sld [smem:[#allocation2 + $0x4]]
        %s302 = sld [smem:[#allocation2 + $0x80]]
        %s303 = sld [smem:[#allocation2 + $0x81]]
        %s304 = sld [smem:[#allocation2 + $0x82]]
        %s305 = sld [smem:[#allocation2 + $0x83]]
        %s306 = sld [smem:[#allocation2 + $0x84]]
        %s307 = sld [smem:[#allocation2 + $0x100]]
        %s308 = sld [smem:[#allocation2 + $0x101]]
        %s309 = sld [smem:[#allocation2 + $0x102]]
        %s310 = sld [smem:[#allocation2 + $0x103]]
        %s311 = sld [smem:[#allocation2 + $0x104]]
        %s312 = sld [smem:[#allocation2 + $0x180]]
        %s313 = sld [smem:[#allocation2 + $0x181]]
        %s314 = sld [smem:[#allocation2 + $0x182]]
        %s315 = sld [smem:[#allocation2 + $0x183]]
        %s316 = sld [smem:[#allocation2 + $0x184]]
        %s317 = sld [smem:[#allocation7]]
        %s318 = sld [smem:[#allocation7 + $0x1]]
        %s319 = sld [smem:[#allocation7 + $0x2]]
        %s320 = sld [smem:[#allocation7 + $0x3]]
        %s321 = sld [smem:[#allocation9]]
        %s322 = sld [smem:[#allocation9 + $0x1]]
        %s323 = sld [smem:[#allocation9 + $0x2]]
        %s324 = sld [smem:[#allocation9 + $0x3]]
        %s325 = sld [smem:[#allocation9 + $0x4]]
        %s326 = sld [smem:[#allocation9 + $0x5]]
        %s327 = sld [smem:[#allocation9 + $0x6]]
        %s328 = sld [smem:[#allocation9 + $0x7]]
        %s329 = sld [smem:[#allocation9 + $0x8]]
        %s330 = sld [smem:[#allocation9 + $0x9]]
        %s331 = sld [smem:[#allocation9 + $0xa]]
        %s332 = sld [smem:[#allocation9 + $0xb]]
        %s333 = sld [smem:[#allocation9 + $0x80]]
        %s334 = sld [smem:[#allocation9 + $0x81]]
        %s335 = sld [smem:[#allocation9 + $0x82]]
        %s336 = sld [smem:[#allocation9 + $0x83]]
        %s337 = sld [smem:[#allocation9 + $0x84]]
        %s338 = sld [smem:[#allocation9 + $0x85]]
        %s339 = sld [smem:[#allocation9 + $0x86]]
        %s340 = sld [smem:[#allocation9 + $0x87]]
        %s341 = sld [smem:[#allocation9 + $0x88]]
        %s342 = sld [smem:[#allocation9 + $0x89]]
        %s343 = sld [smem:[#allocation9 + $0x8a]]
        %s344 = sld [smem:[#allocation9 + $0x8b]]
        %s345 = sld [smem:[#allocation9 + $0x100]]
        %s346 = sld [smem:[#allocation9 + $0x101]]
        %s347 = sld [smem:[#allocation9 + $0x102]]
        %s348 = sld [smem:[#allocation9 + $0x103]]
        %s349 = sld [smem:[#allocation9 + $0x104]]
        %s350 = sld [smem:[#allocation9 + $0x105]]
        %s351 = sld [smem:[#allocation9 + $0x106]]
        %s352 = sld [smem:[#allocation9 + $0x107]]
        %s353 = sld [smem:[#allocation9 + $0x108]]
        %s354 = sld [smem:[#allocation9 + $0x109]]
        %s355 = sld [smem:[#allocation9 + $0x10a]]
        %s356 = sld [smem:[#allocation9 + $0x10b]]
        %s357 = sld [smem:[#allocation9 + $0x180]]
        %s358 = sld [smem:[#allocation9 + $0x181]]
        %s359 = sld [smem:[#allocation9 + $0x182]]
        %s360 = sld [smem:[#allocation9 + $0x183]]
        %s361 = sld [smem:[#allocation9 + $0x184]]
        %s362 = sld [smem:[#allocation9 + $0x185]]
        %s363 = sld [smem:[#allocation9 + $0x186]]
        %s364 = sld [smem:[#allocation9 + $0x187]]
        %s365 = sld [smem:[#allocation9 + $0x188]]
        %s366 = sld [smem:[#allocation9 + $0x189]]
        %s367 = sld [smem:[#allocation9 + $0x18a]]
        %s368 = sld [smem:[#allocation9 + $0x18b]]
        %s369 = sld [smem:[#allocation10]]
        %s370 = sld [smem:[#allocation10 + $0x1]]
        %s371 = sld [smem:[#allocation10 + $0x2]]
        %s372 = sld [smem:[#allocation10 + $0x3]]
        %v373 = vld [vmem:[%s268] sm:$0xff]
        %v374 = vld [vmem:[%s268 + $0x8] sm:$0xff]
        %v375 = vld [vmem:[%s268 + $0x10] sm:$0xff]
        %v376 = vld [vmem:[%s268 + $0x18] sm:$0xff]
        %v377 = vstv %s297
        %v378 = vmul.f32 %v377, %v373
        %v379 = vmul.f32 %v377, %v375
        %v380 = vstv %s298
        %v381 = vmul.f32 %v380, %v374
        %v382 = vmul.f32 %v380, %v376
        %v383 = vadd.f32 %v378, %v381
        %v384 = vadd.f32 %v379, %v382
        %v385 = vstv %s299
        %v386 = vmul.f32 %v385, %v373
        %v387 = vmul.f32 %v385, %v375
        %v390 = vrot.slane %v386, 1
        %v391 = vrot.slane %v387, 1
        %v394 = vadd.f32 %v383, %v390
        %v395 = vadd.f32 %v384, %v391
        %v396 = vstv %s300
        %v397 = vmul.f32 %v396, %v374
        %v398 = vmul.f32 %v396, %v376
        %v401 = vrot.slane %v397, 1
        %v402 = vrot.slane %v398, 1
        %v405 = vadd.f32 %v394, %v401
        %v406 = vadd.f32 %v395, %v402
        %v407 = vstv %s301
        %v408 = vmul.f32 %v407, %v373
        %v409 = vmul.f32 %v407, %v375
        %v412 = vrot.slane %v408, 2
        %v413 = vrot.slane %v409, 2
        %v416 = vadd.f32 %v405, %v412
        %v417 = vadd.f32 %v406, %v413
        %v418 = vmul.f32 %v377, %v374
        %v419 = vmul.f32 %v377, %v376
        %v420 = vmul.f32 %v380, %v373
        %v421 = vmul.f32 %v380, %v375
        %v424 = vrot.slane %v420, 1
        %v425 = vrot.slane %v421, 1
        %v428 = vadd.f32 %v418, %v424
        %v429 = vadd.f32 %v419, %v425
        %v430 = vmul.f32 %v385, %v374
        %v431 = vmul.f32 %v385, %v376
        %v434 = vrot.slane %v430, 1
        %v435 = vrot.slane %v431, 1
        %v438 = vadd.f32 %v428, %v434
        %v439 = vadd.f32 %v429, %v435
        %v440 = vmul.f32 %v396, %v373
        %v441 = vmul.f32 %v396, %v375
        %v444 = vrot.slane %v440, 2
        %v445 = vrot.slane %v441, 2
        %v448 = vadd.f32 %v438, %v444
        %v449 = vadd.f32 %v439, %v445
        %v450 = vmul.f32 %v407, %v374
        %v451 = vmul.f32 %v407, %v376
        %v454 = vrot.slane %v450, 2
        %v455 = vrot.slane %v451, 2
        %v458 = vadd.f32 %v448, %v454
        %v459 = vadd.f32 %v449, %v455
        %v460 = vmax.f32 %v416, %v458
        %v461 = vmax.f32 %v417, %v459
        %v462 = vstv %s317
        %v463 = vadd.f32 %v460, %v462
        %v464 = vadd.f32 %v461, %v462
        %v465 = vmax.f32 %v463, 0.0
        %v466 = vmax.f32 %v464, 0.0
        %v467 = vstv %s321
        %v468 = vmul.f32 %v467, %v465
        %v469 = vmul.f32 %v467, %v466
        %v470 = vstv %s333
        %v471 = vmul.f32 %v470, %v465
        %v472 = vmul.f32 %v470, %v466
        %v473 = vstv %s345
        %v474 = vmul.f32 %v473, %v465
        %v475 = vmul.f32 %v473, %v466
        %v476 = vstv %s357
        %v477 = vmul.f32 %v476, %v465
        %v478 = vmul.f32 %v476, %v466
        %v479 = vstv %s322
        %v480 = vmul.f32 %v479, %v465
        %v481 = vmul.f32 %v479, %v466
        %v484 = vrot.slane %v480, 1
        %v485 = vrot.slane %v481, 1
        %v488 = vadd.f32 %v468, %v484
        %v489 = vadd.f32 %v469, %v485
        %v490 = vstv %s334
        %v491 = vmul.f32 %v490, %v465
        %v492 = vmul.f32 %v490, %v466
        %v495 = vrot.slane %v491, 1
        %v496 = vrot.slane %v492, 1
        %v499 = vadd.f32 %v471, %v495
        %v500 = vadd.f32 %v472, %v496
        %v501 = vstv %s346
        %v502 = vmul.f32 %v501, %v465
        %v503 = vmul.f32 %v501, %v466
        %v506 = vrot.slane %v502, 1
        %v507 = vrot.slane %v503, 1
        %v510 = vadd.f32 %v474, %v506
        %v511 = vadd.f32 %v475, %v507
        %v512 = vstv %s358
        %v513 = vmul.f32 %v512, %v465
        %v514 = vmul.f32 %v512, %v466
        %v517 = vrot.slane %v513, 1
        %v518 = vrot.slane %v514, 1
        %v521 = vadd.f32 %v477, %v517
        %v522 = vadd.f32 %v478, %v518
        %v523 = vstv %s323
        %v524 = vmul.f32 %v523, %v465
        %v525 = vmul.f32 %v523, %v466
        %v528 = vrot.slane %v524, 2
        %v529 = vrot.slane %v525, 2
        %v532 = vadd.f32 %v488, %v528
        %v533 = vadd.f32 %v489, %v529
        %v534 = vstv %s335
        %v535 = vmul.f32 %v534, %v465
        %v536 = vmul.f32 %v534, %v466
        %v539 = vrot.slane %v535, 2
        %v540 = vrot.slane %v536, 2
        %v543 = vadd.f32 %v499, %v539
        %v544 = vadd.f32 %v500, %v540
        %v545 = vstv %s347
        %v546 = vmul.f32 %v545, %v465
        %v547 = vmul.f32 %v545, %v466
        %v550 = vrot.slane %v546, 2
        %v551 = vrot.slane %v547, 2
        %v554 = vadd.f32 %v510, %v550
        %v555 = vadd.f32 %v511, %v551
        %v556 = vstv %s359
        %v557 = vmul.f32 %v556, %v465
        %v558 = vmul.f32 %v556, %v466
        %v561 = vrot.slane %v557, 2
        %v562 = vrot.slane %v558, 2
        %v565 = vadd.f32 %v521, %v561
        %v566 = vadd.f32 %v522, %v562
        %v567 = vstv %s302
        %v568 = vmul.f32 %v567, %v373
        %v569 = vmul.f32 %v567, %v375
        %v570 = vstv %s303
        %v571 = vmul.f32 %v570, %v374
        %v572 = vmul.f32 %v570, %v376
        %v573 = vadd.f32 %v568, %v571
        %v574 = vadd.f32 %v569, %v572
        %v575 = vstv %s304
        %v576 = vmul.f32 %v575, %v373
        %v577 = vmul.f32 %v575, %v375
        %v580 = vrot.slane %v576, 1
        %v581 = vrot.slane %v577, 1
        %v584 = vadd.f32 %v573, %v580
        %v585 = vadd.f32 %v574, %v581
        %v586 = vstv %s305
        %v587 = vmul.f32 %v586, %v374
        %v588 = vmul.f32 %v586, %v376
        %v591 = vrot.slane %v587, 1
        %v592 = vrot.slane %v588, 1
        %v595 = vadd.f32 %v584, %v591
        %v596 = vadd.f32 %v585, %v592
        %v597 = vstv %s306
        %v598 = vmul.f32 %v597, %v373
        %v599 = vmul.f32 %v597, %v375
        %v602 = vrot.slane %v598, 2
        %v603 = vrot.slane %v599, 2
        %v606 = vadd.f32 %v595, %v602
        %v607 = vadd.f32 %v596, %v603
        %v608 = vmul.f32 %v567, %v374
        %v609 = vmul.f32 %v567, %v376
        %v610 = vmul.f32 %v570, %v373
        %v611 = vmul.f32 %v570, %v375
        %v614 = vrot.slane %v610, 1
        %v615 = vrot.slane %v611, 1
        %v618 = vadd.f32 %v608, %v614
        %v619 = vadd.f32 %v609, %v615
        %v620 = vmul.f32 %v575, %v374
        %v621 = vmul.f32 %v575, %v376
        %v624 = vrot.slane %v620, 1
        %v625 = vrot.slane %v621, 1
        %v628 = vadd.f32 %v618, %v624
        %v629 = vadd.f32 %v619, %v625
        %v630 = vmul.f32 %v586, %v373
        %v631 = vmul.f32 %v586, %v375
        %v634 = vrot.slane %v630, 2
        %v635 = vrot.slane %v631, 2
        %v638 = vadd.f32 %v628, %v634
        %v639 = vadd.f32 %v629, %v635
        %v640 = vmul.f32 %v597, %v374
        %v641 = vmul.f32 %v597, %v376
        %v644 = vrot.slane %v640, 2
        %v645 = vrot.slane %v641, 2
        %v648 = vadd.f32 %v638, %v644
        %v649 = vadd.f32 %v639, %v645
        %v650 = vmax.f32 %v606, %v648
        %v651 = vmax.f32 %v607, %v649
        %v652 = vstv %s318
        %v653 = vadd.f32 %v650, %v652
        %v654 = vadd.f32 %v651, %v652
        %v655 = vmax.f32 %v653, 0.0
        %v656 = vmax.f32 %v654, 0.0
        %v657 = vstv %s324
        %v658 = vmul.f32 %v657, %v655
        %v659 = vmul.f32 %v657, %v656
        %v660 = vadd.f32 %v532, %v658
        %v661 = vadd.f32 %v533, %v659
        %v662 = vstv %s336
        %v663 = vmul.f32 %v662, %v655
        %v664 = vmul.f32 %v662, %v656
        %v665 = vadd.f32 %v543, %v663
        %v666 = vadd.f32 %v544, %v664
        %v667 = vstv %s348
        %v668 = vmul.f32 %v667, %v655
        %v669 = vmul.f32 %v667, %v656
        %v670 = vadd.f32 %v554, %v668
        %v671 = vadd.f32 %v555, %v669
        %v672 = vstv %s360
        %v673 = vmul.f32 %v672, %v655
        %v674 = vmul.f32 %v672, %v656
        %v675 = vadd.f32 %v565, %v673
        %v676 = vadd.f32 %v566, %v674
        %v677 = vstv %s325
        %v678 = vmul.f32 %v677, %v655
        %v679 = vmul.f32 %v677, %v656
        %v682 = vrot.slane %v678, 1
        %v683 = vrot.slane %v679, 1
        %v686 = vadd.f32 %v660, %v682
        %v687 = vadd.f32 %v661, %v683
        %v688 = vstv %s337
        %v689 = vmul.f32 %v688, %v655
        %v690 = vmul.f32 %v688, %v656
        %v693 = vrot.slane %v689, 1
        %v694 = vrot.slane %v690, 1
        %v697 = vadd.f32 %v665, %v693
        %v698 = vadd.f32 %v666, %v694
        %v699 = vstv %s349
        %v700 = vmul.f32 %v699, %v655
        %v701 = vmul.f32 %v699, %v656
        %v704 = vrot.slane %v700, 1
        %v705 = vrot.slane %v701, 1
        %v708 = vadd.f32 %v670, %v704
        %v709 = vadd.f32 %v671, %v705
        %v710 = vstv %s361
        %v711 = vmul.f32 %v710, %v655
        %v712 = vmul.f32 %v710, %v656
        %v715 = vrot.slane %v711, 1
        %v716 = vrot.slane %v712, 1
        %v719 = vadd.f32 %v675, %v715
        %v720 = vadd.f32 %v676, %v716
        %v721 = vstv %s326
        %v722 = vmul.f32 %v721, %v655
        %v723 = vmul.f32 %v721, %v656
        %v726 = vrot.slane %v722, 2
        %v727 = vrot.slane %v723, 2
        %v730 = vadd.f32 %v686, %v726
        %v731 = vadd.f32 %v687, %v727
        %v732 = vstv %s338
        %v733 = vmul.f32 %v732, %v655
        %v734 = vmul.f32 %v732, %v656
        %v737 = vrot.slane %v733, 2
        %v738 = vrot.slane %v734, 2
        %v741 = vadd.f32 %v697, %v737
        %v742 = vadd.f32 %v698, %v738
        %v743 = vstv %s350
        %v744 = vmul.f32 %v743, %v655
        %v745 = vmul.f32 %v743, %v656
        %v748 = vrot.slane %v744, 2
        %v749 = vrot.slane %v745, 2
        %v752 = vadd.f32 %v708, %v748
        %v753 = vadd.f32 %v709, %v749
        %v754 = vstv %s362
        %v755 = vmul.f32 %v754, %v655
        %v756 = vmul.f32 %v754, %v656
        %v759 = vrot.slane %v755, 2
        %v760 = vrot.slane %v756, 2
        %v763 = vadd.f32 %v719, %v759
        %v764 = vadd.f32 %v720, %v760
        %v765 = vstv %s307
        %v766 = vmul.f32 %v765, %v373
        %v767 = vmul.f32 %v765, %v375
        %v768 = vstv %s308
        %v769 = vmul.f32 %v768, %v374
        %v770 = vmul.f32 %v768, %v376
        %v771 = vadd.f32 %v766, %v769
        %v772 = vadd.f32 %v767, %v770
        %v773 = vstv %s309
        %v774 = vmul.f32 %v773, %v373
        %v775 = vmul.f32 %v773, %v375
        %v778 = vrot.slane %v774, 1
        %v779 = vrot.slane %v775, 1
        %v782 = vadd.f32 %v771, %v778
        %v783 = vadd.f32 %v772, %v779
        %v784 = vstv %s310
        %v785 = vmul.f32 %v784, %v374
        %v786 = vmul.f32 %v784, %v376
        %v789 = vrot.slane %v785, 1
        %v790 = vrot.slane %v786, 1
        %v793 = vadd.f32 %v782, %v789
        %v794 = vadd.f32 %v783, %v790
        %v795 = vstv %s311
        %v796 = vmul.f32 %v795, %v373
        %v797 = vmul.f32 %v795, %v375
        %v800 = vrot.slane %v796, 2
        %v801 = vrot.slane %v797, 2
        %v804 = vadd.f32 %v793, %v800
        %v805 = vadd.f32 %v794, %v801
        %v806 = vmul.f32 %v765, %v374
        %v807 = vmul.f32 %v765, %v376
        %v808 = vmul.f32 %v768, %v373
        %v809 = vmul.f32 %v768, %v375
        %v812 = vrot.slane %v808, 1
        %v813 = vrot.slane %v809, 1
        %v816 = vadd.f32 %v806, %v812
        %v817 = vadd.f32 %v807, %v813
        %v818 = vmul.f32 %v773, %v374
        %v819 = vmul.f32 %v773, %v376
        %v822 = vrot.slane %v818, 1
        %v823 = vrot.slane %v819, 1
        %v826 = vadd.f32 %v816, %v822
        %v827 = vadd.f32 %v817, %v823
        %v828 = vmul.f32 %v784, %v373
        %v829 = vmul.f32 %v784, %v375
        %v832 = vrot.slane %v828, 2
        %v833 = vrot.slane %v829, 2
        %v836 = vadd.f32 %v826, %v832
        %v837 = vadd.f32 %v827, %v833
        %v838 = vmul.f32 %v795, %v374
        %v839 = vmul.f32 %v795, %v376
        %v842 = vrot.slane %v838, 2
        %v843 = vrot.slane %v839, 2
        %v846 = vadd.f32 %v836, %v842
        %v847 = vadd.f32 %v837, %v843
        %v848 = vmax.f32 %v804, %v846
        %v849 = vmax.f32 %v805, %v847
        %v850 = vstv %s319
        %v851 = vadd.f32 %v848, %v850
        %v852 = vadd.f32 %v849, %v850
        %v853 = vmax.f32 %v851, 0.0
        %v854 = vmax.f32 %v852, 0.0
        %v855 = vstv %s327
        %v856 = vmul.f32 %v855, %v853
        %v857 = vmul.f32 %v855, %v854
        %v858 = vadd.f32 %v730, %v856
        %v859 = vadd.f32 %v731, %v857
        %v860 = vstv %s339
        %v861 = vmul.f32 %v860, %v853
        %v862 = vmul.f32 %v860, %v854
        %v863 = vadd.f32 %v741, %v861
        %v864 = vadd.f32 %v742, %v862
        %v865 = vstv %s351
        %v866 = vmul.f32 %v865, %v853
        %v867 = vmul.f32 %v865, %v854
        %v868 = vadd.f32 %v752, %v866
        %v869 = vadd.f32 %v753, %v867
        %v870 = vstv %s363
        %v871 = vmul.f32 %v870, %v853
        %v872 = vmul.f32 %v870, %v854
        %v873 = vadd.f32 %v763, %v871
        %v874 = vadd.f32 %v764, %v872
        %v875 = vstv %s328
        %v876 = vmul.f32 %v875, %v853
        %v877 = vmul.f32 %v875, %v854
        %v880 = vrot.slane %v876, 1
        %v881 = vrot.slane %v877, 1
        %v884 = vadd.f32 %v858, %v880
        %v885 = vadd.f32 %v859, %v881
        %v886 = vstv %s340
        %v887 = vmul.f32 %v886, %v853
        %v888 = vmul.f32 %v886, %v854
        %v891 = vrot.slane %v887, 1
        %v892 = vrot.slane %v888, 1
        %v895 = vadd.f32 %v863, %v891
        %v896 = vadd.f32 %v864, %v892
        %v897 = vstv %s352
        %v898 = vmul.f32 %v897, %v853
        %v899 = vmul.f32 %v897, %v854
        %v902 = vrot.slane %v898, 1
        %v903 = vrot.slane %v899, 1
        %v906 = vadd.f32 %v868, %v902
        %v907 = vadd.f32 %v869, %v903
        %v908 = vstv %s364
        %v909 = vmul.f32 %v908, %v853
        %v910 = vmul.f32 %v908, %v854
        %v913 = vrot.slane %v909, 1
        %v914 = vrot.slane %v910, 1
        %v917 = vadd.f32 %v873, %v913
        %v918 = vadd.f32 %v874, %v914
        %v919 = vstv %s329
        %v920 = vmul.f32 %v919, %v853
        %v921 = vmul.f32 %v919, %v854
        %v924 = vrot.slane %v920, 2
        %v925 = vrot.slane %v921, 2
        %v928 = vadd.f32 %v884, %v924
        %v929 = vadd.f32 %v885, %v925
        %v930 = vstv %s341
        %v931 = vmul.f32 %v930, %v853
        %v932 = vmul.f32 %v930, %v854
        %v935 = vrot.slane %v931, 2
        %v936 = vrot.slane %v932, 2
        %v939 = vadd.f32 %v895, %v935
        %v940 = vadd.f32 %v896, %v936
        %v941 = vstv %s353
        %v942 = vmul.f32 %v941, %v853
        %v943 = vmul.f32 %v941, %v854
        %v946 = vrot.slane %v942, 2
        %v947 = vrot.slane %v943, 2
        %v950 = vadd.f32 %v906, %v946
        %v951 = vadd.f32 %v907, %v947
        %v952 = vstv %s365
        %v953 = vmul.f32 %v952, %v853
        %v954 = vmul.f32 %v952, %v854
        %v957 = vrot.slane %v953, 2
        %v958 = vrot.slane %v954, 2
        %v961 = vadd.f32 %v917, %v957
        %v962 = vadd.f32 %v918, %v958
        %v963 = vstv %s312
        %v964 = vmul.f32 %v963, %v373
        %v965 = vmul.f32 %v963, %v375
        %v966 = vstv %s313
        %v967 = vmul.f32 %v966, %v374
        %v968 = vmul.f32 %v966, %v376
        %v969 = vadd.f32 %v964, %v967
        %v970 = vadd.f32 %v965, %v968
        %v971 = vstv %s314
        %v972 = vmul.f32 %v971, %v373
        %v973 = vmul.f32 %v971, %v375
        %v976 = vrot.slane %v972, 1
        %v977 = vrot.slane %v973, 1
        %v980 = vadd.f32 %v969, %v976
        %v981 = vadd.f32 %v970, %v977
        %v982 = vstv %s315
        %v983 = vmul.f32 %v982, %v374
        %v984 = vmul.f32 %v982, %v376
        %v987 = vrot.slane %v983, 1
        %v988 = vrot.slane %v984, 1
        %v991 = vadd.f32 %v980, %v987
        %v992 = vadd.f32 %v981, %v988
        %v993 = vstv %s316
        %v994 = vmul.f32 %v993, %v373
        %v995 = vmul.f32 %v993, %v375
        %v998 = vrot.slane %v994, 2
        %v999 = vrot.slane %v995, 2
        %v1002 = vadd.f32 %v991, %v998
        %v1003 = vadd.f32 %v992, %v999
        %v1004 = vmul.f32 %v963, %v374
        %v1005 = vmul.f32 %v963, %v376
        %v1006 = vmul.f32 %v966, %v373
        %v1007 = vmul.f32 %v966, %v375
        %v1010 = vrot.slane %v1006, 1
        %v1011 = vrot.slane %v1007, 1
        %v1014 = vadd.f32 %v1004, %v1010
        %v1015 = vadd.f32 %v1005, %v1011
        %v1016 = vmul.f32 %v971, %v374
        %v1017 = vmul.f32 %v971, %v376
        %v1020 = vrot.slane %v1016, 1
        %v1021 = vrot.slane %v1017, 1
        %v1024 = vadd.f32 %v1014, %v1020
        %v1025 = vadd.f32 %v1015, %v1021
        %v1026 = vmul.f32 %v982, %v373
        %v1027 = vmul.f32 %v982, %v375
        %v1030 = vrot.slane %v1026, 2
        %v1031 = vrot.slane %v1027, 2
        %v1034 = vadd.f32 %v1024, %v1030
        %v1035 = vadd.f32 %v1025, %v1031
        %v1036 = vmul.f32 %v993, %v374
        %v1037 = vmul.f32 %v993, %v376
        %v1040 = vrot.slane %v1036, 2
        %v1041 = vrot.slane %v1037, 2
        %v1044 = vadd.f32 %v1034, %v1040
        %v1045 = vadd.f32 %v1035, %v1041
        %v1046 = vmax.f32 %v1002, %v1044
        %v1047 = vmax.f32 %v1003, %v1045
        %v1048 = vstv %s320
        %v1049 = vadd.f32 %v1046, %v1048
        %v1050 = vadd.f32 %v1047, %v1048
        %v1051 = vmax.f32 %v1049, 0.0
        %v1052 = vmax.f32 %v1050, 0.0
        %v1053 = vstv %s330
        %v1054 = vmul.f32 %v1053, %v1051
        %v1055 = vmul.f32 %v1053, %v1052
        %v1056 = vadd.f32 %v928, %v1054
        %v1057 = vadd.f32 %v929, %v1055
        %v1058 = vstv %s342
        %v1059 = vmul.f32 %v1058, %v1051
        %v1060 = vmul.f32 %v1058, %v1052
        %v1061 = vadd.f32 %v939, %v1059
        %v1062 = vadd.f32 %v940, %v1060
        %v1063 = vstv %s354
        %v1064 = vmul.f32 %v1063, %v1051
        %v1065 = vmul.f32 %v1063, %v1052
        %v1066 = vadd.f32 %v950, %v1064
        %v1067 = vadd.f32 %v951, %v1065
        %v1068 = vstv %s366
        %v1069 = vmul.f32 %v1068, %v1051
        %v1070 = vmul.f32 %v1068, %v1052
        %v1071 = vadd.f32 %v961, %v1069
        %v1072 = vadd.f32 %v962, %v1070
        %v1073 = vstv %s331
        %v1074 = vmul.f32 %v1073, %v1051
        %v1075 = vmul.f32 %v1073, %v1052
        %v1078 = vrot.slane %v1074, 1
        %v1079 = vrot.slane %v1075, 1
        %v1082 = vadd.f32 %v1056, %v1078
        %v1083 = vadd.f32 %v1057, %v1079
        %v1084 = vstv %s343
        %v1085 = vmul.f32 %v1084, %v1051
        %v1086 = vmul.f32 %v1084, %v1052
        %v1089 = vrot.slane %v1085, 1
        %v1090 = vrot.slane %v1086, 1
        %v1093 = vadd.f32 %v1061, %v1089
        %v1094 = vadd.f32 %v1062, %v1090
        %v1095 = vstv %s355
        %v1096 = vmul.f32 %v1095, %v1051
        %v1097 = vmul.f32 %v1095, %v1052
        %v1100 = vrot.slane %v1096, 1
        %v1101 = vrot.slane %v1097, 1
        %v1104 = vadd.f32 %v1066, %v1100
        %v1105 = vadd.f32 %v1067, %v1101
        %v1106 = vstv %s367
        %v1107 = vmul.f32 %v1106, %v1051
        %v1108 = vmul.f32 %v1106, %v1052
        %v1111 = vrot.slane %v1107, 1
        %v1112 = vrot.slane %v1108, 1
        %v1115 = vadd.f32 %v1071, %v1111
        %v1116 = vadd.f32 %v1072, %v1112
        %v1117 = vstv %s332
        %v1118 = vmul.f32 %v1117, %v1051
        %v1119 = vmul.f32 %v1117, %v1052
        %v1122 = vrot.slane %v1118, 2
        %v1123 = vrot.slane %v1119, 2
        %v1126 = vadd.f32 %v1082, %v1122
        %v1127 = vadd.f32 %v1083, %v1123
        %v1128 = vstv %s344
        %v1129 = vmul.f32 %v1128, %v1051
        %v1130 = vmul.f32 %v1128, %v1052
        %v1133 = vrot.slane %v1129, 2
        %v1134 = vrot.slane %v1130, 2
        %v1137 = vadd.f32 %v1093, %v1133
        %v1138 = vadd.f32 %v1094, %v1134
        %v1139 = vstv %s356
        %v1140 = vmul.f32 %v1139, %v1051
        %v1141 = vmul.f32 %v1139, %v1052
        %v1144 = vrot.slane %v1140, 2
        %v1145 = vrot.slane %v1141, 2
        %v1148 = vadd.f32 %v1104, %v1144
        %v1149 = vadd.f32 %v1105, %v1145
        %v1150 = vstv %s368
        %v1151 = vmul.f32 %v1150, %v1051
        %v1152 = vmul.f32 %v1150, %v1052
        %v1155 = vrot.slane %v1151, 2
        %v1156 = vrot.slane %v1152, 2
        %v1159 = vadd.f32 %v1115, %v1155
        %v1160 = vadd.f32 %v1116, %v1156
        %v1161 = vstv %s369
        %v1162 = vadd.f32 %v1126, %v1161
        %v1163 = vadd.f32 %v1127, %v1161
        %v1164 = vmax.f32 %v1162, 0.0
        %v1165 = vmax.f32 %v1163, 0.0
        %v1166 = vstv %s370
        %v1167 = vadd.f32 %v1137, %v1166
        %v1168 = vadd.f32 %v1138, %v1166
        %v1169 = vmax.f32 %v1167, 0.0
        %v1170 = vmax.f32 %v1168, 0.0
        %v1171 = vmax.f32 %v1164, %v1169
        %v1172 = vmax.f32 %v1165, %v1170
        %v1173 = vstv %s371
        %v1174 = vadd.f32 %v1148, %v1173
        %v1175 = vadd.f32 %v1149, %v1173
        %v1176 = vmax.f32 %v1174, 0.0
        %v1177 = vmax.f32 %v1175, 0.0
        %v1178 = vmax.f32 %v1171, %v1176
        %v1179 = vmax.f32 %v1172, %v1177
        %v1180 = vstv %s372
        %v1181 = vadd.f32 %v1159, %v1180
        %v1182 = vadd.f32 %v1160, %v1180
        %v1183 = vmax.f32 %v1181, 0.0
        %v1184 = vmax.f32 %v1182, 0.0
        %v1185 = vmax.f32 %v1178, %v1183
        %v1186 = vmax.f32 %v1179, %v1184
        %vm1187 = vcmask 1043456
        %v1188 = vsel %vm1187, %v1185, -inf
        %v1189 = vrot.slane %v1188, 4
        %v1190 = vmax.f32 %v1188, %v1189
        %v1191 = vrot.slane %v1190, 2
        %v1192 = vmax.f32 %v1190, %v1191
        %v1193 = vrot.slane %v1192, 1
        %v1194 = vmax.f32 %v1192, %v1193
        %v1195 = vsel %vm1187, %v1186, -inf
        %v1196 = vrot.slane %v1195, 4
        %v1197 = vmax.f32 %v1195, %v1196
        %v1198 = vrot.slane %v1197, 2
        %v1199 = vmax.f32 %v1197, %v1198
        %v1200 = vrot.slane %v1199, 1
        %v1201 = vmax.f32 %v1199, %v1200
        %vm1204 = vcmask 1041409
        %v1205 = vsel %vm1204, %v1201, %v1194
        %1207 = vst [vmem:[%s296] sm:$0x3] %v1205
        %s1208 = sand.u32 %s143, 1
        %s1209 = scalar_lea.sflag [#allocation4], %s1208
        %s1210 = sand.u32 %s143, 1
        %s1211 = smul.addr %s1210, 2
        %s1212 = scalar_lea.vmem [#allocation12], %s1211
        // Predicated region
        $region61: #{tpu_custom_call.1} parent=39 // pred_check
          %p1213 = pneg %p153
        $region62: #{tpu_custom_call.1} parent=39 // pred_check_branch
          %1215 = sbr.rel (%p1213) target = $region64
        $region63: #{tpu_custom_call.1} parent=39 // pred_region
          %1217 = vsyncadd %s1209, 0
          %s1218 = smul.addr %s25, 2
          %s1219 = scalar_lea.hbm %s5, %s1218
          %s1221 = sshll.u32 %s1212, 4
          %s1222 = int_to_ptr.vmem [resolvable:$true] %s1221
          %s1223 = sshll.u32 %s1219, 4
          %s1224 = int_to_ptr.hbm [resolvable:$true] %s1223
          %1226 = dma.vmem_to_hbm [thread:$0]  %s1222, 32, %s1224, %s1209
        $region64: #{tpu_custom_call.1} parent=39 // pred_fallthru
          _
      $region40: #{tpu_custom_call.1} parent=5 // pred_fallthru
        _
      %p1227 = scmp.le.s32.totalorder 2, %s20
      // Predicated region
      $region65: #{tpu_custom_call.1} parent=5 // pred_check
        %p1228 = pneg %p1227
      $region66: #{tpu_custom_call.1} parent=5 // pred_check_branch
        %1230 = sbr.rel (%p1228) target = $region68
      $region67: #{tpu_custom_call.1} parent=5 // pred_region
        %s1231 = ssub.s32 %s20, 2
        // Predicated region
        $region69: #{tpu_custom_call.1} parent=67 // pred_check
          %p1232 = pneg %p159
        $region70: #{tpu_custom_call.1} parent=67 // pred_check_branch
          %1234 = sbr.rel (%p1232) target = $region72
        $region71: #{tpu_custom_call.1} parent=67 // pred_region
          %s1235 = sand.u32 %s144, 1
          %s1236 = scalar_lea.sflag [#allocation4], %s1235
          %s1237 = sand.u32 %s144, 1
          %s1238 = smul.addr %s1237, 2
          %s1239 = scalar_lea.vmem [#allocation12], %s1238
          %1241 = dma.done %s1236, 32
        $region72: #{tpu_custom_call.1} parent=67 // pred_fallthru
          _
      $region68: #{tpu_custom_call.1} parent=5 // pred_fallthru
        _
    $region6: #{tpu_custom_call.1} parent=1 // loop_footer
      %s24 = sadd.s32 1, %s20
    $region7: #{tpu_custom_call.1} parent=1 // loop_footer_branch
      %19 = sbr.rel target = $region3
    $region8: #{tpu_custom_call.1} parent=1 // loop_exit
      _
    %1242 = vsyncpa [#allocation3], 1
    %s1243 = scalar_lea.sflag [#allocation3], 1
    %1244 = vsyncpa %s1243, 1
    %1245 = vsyncpa [#allocation4], 1
    %s1246 = scalar_lea.sflag [#allocation4], 1
    %1247 = vsyncpa %s1246, 1
    %1248 = vsyncpa [#allocation5], 1
    %s1249 = scalar_lea.sflag [#allocation5], 1
    %1250 = vsyncpa %s1249, 1
    %1251 = vsyncpa [#allocation8], 1
    %1252 = vsyncpa [#allocation6], 1
    %s1253 = scalar_lea.sflag [#allocation6], 1
    %1254 = vsyncpa %s1253, 1

</llo_original>
